<compile_context>
chip_gen: v7x
topology: tpu7x:2x2x1
jax: 0.10.0
libtpu: 0.0.40
codegen_flags: <defaults>
</compile_context>

<pallas_src>
import math
from functools import partial

import jax
import jax.numpy as jnp
import numpy as np
from jax import lax
from jax.experimental import pallas as pl
from jax.experimental.pallas import tpu as pltpu

LN_EPS = 1e-5

_ACTIVATIONS = {
    "relu": lambda t: jnp.maximum(t, 0.0),
    "gelu": lambda t: jax.nn.gelu(t, approximate=True),
    "tanh": jnp.tanh,
    "sigmoid": jax.nn.sigmoid,
}


def _layer_norm(t, gamma, beta):
    mu = jnp.mean(t, axis=-1, keepdims=True)
    var = jnp.mean((t - mu) ** 2, axis=-1, keepdims=True)
    return (t - mu) * lax.rsqrt(var + LN_EPS) * gamma + beta


def _encoder_layer_kernel(
    x_ref, mask_ref,
    wq_ref, bq_ref, wk_ref, bk_ref, wv_ref, bv_ref, wo_ref, bo_ref,
    ln1_g_ref, ln1_b_ref,
    w1_ref, b1_ref, w2_ref, b2_ref,
    ln2_g_ref, ln2_b_ref,
    out_ref, attnw_ref=None,
    *, num_heads, matmul_dtype, activation,
):
    BB, S, D = x_ref.shape
    H = num_heads
    Dh = D // H
    scale = 1.0 / math.sqrt(Dh)
    act_fn = _ACTIVATIONS[activation]

    def mm(a, b):
        return jnp.dot(a.astype(matmul_dtype), b.astype(matmul_dtype),
                       preferred_element_type=jnp.float32)

    x = x_ref[...].astype(jnp.float32)       # (BB, S, D)
    x2 = x.reshape(BB * S, D)                # row slab for projections / FFN

    # ---- QKV projections: one (BB*S, D) x (D, D) MXU matmul each ------------
    # The 1/sqrt(Dh) scale is folded into q once (cheaper than scaling scores).
    q3 = ((mm(x2, wq_ref[...]) + bq_ref[...]) * scale).reshape(BB, S, D)
    k3 = (mm(x2, wk_ref[...]) + bk_ref[...]).reshape(BB, S, D)
    v3 = (mm(x2, wv_ref[...]) + bv_ref[...]).reshape(BB, S, D)

    # ---- additive mask bias, hoisted out of the head loop --------------------
    neg = (mask_ref[...].astype(jnp.float32) * (-1e9)).reshape(BB, 1, S)

    # ---- per-head attention, batched over the batch rows of this block -------
    # Static lane slices per head; softmax math in f32.
    ctx_heads = []
    for h in range(H):
        sl = slice(h * Dh, (h + 1) * Dh)
        qh, kh, vh = q3[:, :, sl], k3[:, :, sl], v3[:, :, sl]

        scores = jnp.einsum(
            "bqd,bkd->bqk",
            qh.astype(matmul_dtype), kh.astype(matmul_dtype),
            preferred_element_type=jnp.float32) + neg
        scores = scores - jnp.max(scores, axis=-1, keepdims=True)
        e = jnp.exp(scores)
        denom = jnp.sum(e, axis=-1, keepdims=True)

        if attnw_ref is not None:
            # Exact softmax for the user-visible weights; write this head's
            # weights straight to the lane-dense output slab (bounds liveness).
            p = e / denom
            attnw_ref[:, :, h * S:(h + 1) * S] = p.astype(attnw_ref.dtype)
        else:
            # Fast path: EUP approximate reciprocal (separate issue slot).
            p = e * pl.reciprocal(denom, approx=True)

        ctx_heads.append(jnp.einsum(
            "bqk,bkd->bqd",
            p.astype(matmul_dtype), vh.astype(matmul_dtype),
            preferred_element_type=jnp.float32))

    # Heads stay in vregs: lane-concat + one (BB*S, D) x (D, D) output proj.
    ctx = jnp.concatenate(ctx_heads, axis=-1).reshape(BB * S, D)
    attn = mm(ctx, wo_ref[...]) + bo_ref[...]

    # ---- residual + LayerNorm, FFN, residual + LayerNorm ---------------------
    y = _layer_norm(attn + x2, ln1_g_ref[...], ln1_b_ref[...])
    ff = act_fn(mm(y, w1_ref[...]) + b1_ref[...])
    ff = mm(ff, w2_ref[...]) + b2_ref[...]
    z = _layer_norm(ff + y, ln2_g_ref[...], ln2_b_ref[...])
    out_ref[...] = z.reshape(BB, S, D).astype(out_ref.dtype)


def _default_block_b(B):
    """>=2 grid steps when possible so v7x's two TensorCores both get work."""
    if B <= 1:
        return 1
    for cand in range(B // 2, 0, -1):
        if B % cand == 0:
            return cand
    return 1


def transformer_encoder_layer(x, mask, w, num_heads, *,
                              block_b=None,
                              return_attn_weights=False,
                              matmul_dtype=jnp.bfloat16,
                              attn_weights_dtype=jnp.float32,
                              activation="relu",
                              single_buffer_weights=True):
    B, S, D = x.shape
    Dff = w["w1"].shape[1]
    H = num_heads
    assert D % H == 0

    if block_b is None:
        block_b = _default_block_b(B)
    assert B % block_b == 0
    n_steps = B // block_b

    # Pre-cast the six weight matrices to the MXU dtype once (halves weight
    # DMA/VMEM at bf16); biases and LayerNorm params stay f32 (added after the
    # f32 accumulation).
    mats = ("wq", "wk", "wv", "wo", "w1", "w2")
    wc = {k: (v.astype(matmul_dtype) if k in mats else v.astype(jnp.float32))
          for k, v in w.items()}

    # ---- explicit VMEM budget (default scoped limit is only 16/32 MiB) ------
    f32b = 4
    itm = jnp.dtype(matmul_dtype).itemsize
    act_blk = block_b * S * D * f32b
    attnw_blk = (block_b * S * H * S * jnp.dtype(attn_weights_dtype).itemsize
                 if return_attn_weights else 0)
    wbytes = (4 * D * D + 2 * D * Dff) * itm + (6 * D + Dff) * f32b
    live = 10 * act_blk + 3 * block_b * H * S * S * f32b
    wt_bufs = 1 if (single_buffer_weights and n_steps > 1) else 2
    needed = 2 * (2 * act_blk + attnw_blk) + wt_bufs * wbytes + live
    vmem_limit = int(min(max(needed * 5 // 4, 32 * 2**20), 100 * 2**20))

    kernel = partial(_encoder_layer_kernel, num_heads=H,
                     matmul_dtype=matmul_dtype, activation=activation)

    out_shapes = [jax.ShapeDtypeStruct((B, S, D), x.dtype)]
    out_specs = [pl.BlockSpec((block_b, S, D), lambda b: (b, 0, 0))]
    if return_attn_weights:
        # lane-dense (B, S, H*S) slab; wrapper restores PyTorch (B, H, S, S).
        out_shapes.append(jax.ShapeDtypeStruct((B, S, H * S), attn_weights_dtype))
        out_specs.append(pl.BlockSpec((block_b, S, H * S), lambda b: (b, 0, 0)))

    weight_shapes = [
        (D, D), (1, D),      # wq, bq
        (D, D), (1, D),      # wk, bk
        (D, D), (1, D),      # wv, bv
        (D, D), (1, D),      # wo, bo
        (1, D), (1, D),      # ln1 gamma, beta
        (D, Dff), (1, Dff),  # w1, b1
        (Dff, D), (1, D),    # w2, b2
        (1, D), (1, D),      # ln2 gamma, beta
    ]
    operands = (
        x, mask,
        wc["wq"], wc["bq"], wc["wk"], wc["bk"], wc["wv"], wc["bv"],
        wc["wo"], wc["bo"], wc["ln1_g"], wc["ln1_b"],
        wc["w1"], wc["b1"], wc["w2"], wc["b2"], wc["ln2_g"], wc["ln2_b"],
    )

    def _invoke(use_single_buffer):
        extra = {}
        if use_single_buffer and n_steps > 1:
            # grid-invariant weights: double-buffering them buys nothing.
            extra = dict(pipeline_mode=pl.Buffered(1))
        wspecs = [pl.BlockSpec(s, lambda b: (0, 0), **extra) for s in weight_shapes]
        in_specs = [
            pl.BlockSpec((block_b, S, D), lambda b: (b, 0, 0)),        # x
            pl.BlockSpec((block_b, 1, 1, S), lambda b: (b, 0, 0, 0)),  # mask
        ] + wspecs
        return pl.pallas_call(
            kernel,
            out_shape=tuple(out_shapes),
            grid=(n_steps,),
            in_specs=in_specs,
            out_specs=tuple(out_specs),
            compiler_params=pltpu.CompilerParams(
                dimension_semantics=("parallel",),
                vmem_limit_bytes=vmem_limit),
        )(*operands)

    try:
        results = _invoke(single_buffer_weights)
    except Exception:
        if not (single_buffer_weights and n_steps > 1):
            raise
        # Graceful degrade for jax versions without BlockSpec pipeline_mode.
        results = _invoke(False)

    if return_attn_weights:
        out, attnw_slab = results
        attnw = attnw_slab.reshape(B, S, H, S).transpose(0, 2, 1, 3)
        return out, attnw
    (out,) = results
    return out


def reference(x, mask, w, num_heads):
    """Pure-JAX reference of the same forward pass."""
    B, S, D = x.shape
    H = num_heads
    Dh = D // H

    def ln(t, g, b):
        mu = jnp.mean(t, -1, keepdims=True)
        var = jnp.mean((t - mu) ** 2, -1, keepdims=True)
        return (t - mu) * lax.rsqrt(var + LN_EPS) * g + b

    q = x @ w["wq"] + w["bq"]
    k = x @ w["wk"] + w["bk"]
    v = x @ w["wv"] + w["bv"]
    qh = q.reshape(B, S, H, Dh).transpose(0, 2, 1, 3)
    kh = k.reshape(B, S, H, Dh).transpose(0, 2, 1, 3)
    vh = v.reshape(B, S, H, Dh).transpose(0, 2, 1, 3)
    scores = jnp.einsum("bhqd,bhkd->bhqk", qh, kh) / math.sqrt(Dh)
    scores = scores + mask * (-1e9)
    p = jax.nn.softmax(scores, axis=-1)
    attn = jnp.einsum("bhqk,bhkd->bhqd", p, vh).transpose(0, 2, 1, 3).reshape(B, S, D)
    attn = attn @ w["wo"] + w["bo"]
    yn = ln(attn + x, w["ln1_g"], w["ln1_b"])
    ff = jnp.maximum(yn @ w["w1"] + w["b1"], 0.0) @ w["w2"] + w["b2"]
    out = ln(ff + yn, w["ln2_g"], w["ln2_b"])
    return out, p


if __name__ == "__main__":
    # params: d_embed_enc=32, d_ff=64, num_heads=4, ff_activation='relu',
    #         dropout=0.0 (eval), layer_norm_eps=1e-5
    B, S, D, H, Dff = 2, 8, 32, 4, 64

    key = jax.random.PRNGKey(0)
    keys = jax.random.split(key, 12)
    s = 0.05

    w = {
        "wq": jax.random.normal(keys[0], (D, D), jnp.float32) * s,
        "bq": jax.random.normal(keys[1], (1, D), jnp.float32) * s,
        "wk": jax.random.normal(keys[2], (D, D), jnp.float32) * s,
        "bk": jax.random.normal(keys[3], (1, D), jnp.float32) * s,
        "wv": jax.random.normal(keys[4], (D, D), jnp.float32) * s,
        "bv": jax.random.normal(keys[5], (1, D), jnp.float32) * s,
        "wo": jax.random.normal(keys[6], (D, D), jnp.float32) * s,
        "bo": jax.random.normal(keys[7], (1, D), jnp.float32) * s,
        "ln1_g": 1.0 + 0.1 * jax.random.normal(keys[8], (1, D), jnp.float32),
        "ln1_b": 0.1 * jax.random.normal(keys[9], (1, D), jnp.float32),
        "w1": jax.random.normal(keys[10], (D, Dff), jnp.float32) * s,
        "b1": jnp.zeros((1, Dff), jnp.float32),
        "w2": jax.random.normal(keys[11], (Dff, D), jnp.float32) * s,
        "b2": jnp.zeros((1, D), jnp.float32),
        "ln2_g": jnp.ones((1, D), jnp.float32),
        "ln2_b": jnp.zeros((1, D), jnp.float32),
    }

    x = jax.random.normal(jax.random.PRNGKey(42), (B, S, D), jnp.float32)

    # mask: 1.0 at padded key positions, 0.0 otherwise; shape (B, 1, 1, S)
    mask_np = np.zeros((B, 1, 1, S), dtype=np.float32)
    mask_np[1, 0, 0, -2:] = 1.0  # pad last 2 positions of batch element 1
    mask = jnp.asarray(mask_np)

    # 1) Exact-math path (f32 MXU operands, exact softmax) with attention
    #    weights, collapsed batch grid (v5e/v6e style, single grid step).
    out_f32, attnw = transformer_encoder_layer(
        x, mask, w, num_heads=H, block_b=B,
        return_attn_weights=True, matmul_dtype=jnp.float32)

    # 2) Default fast path: bf16 MXU operands, approx reciprocal, no attnw,
    #    >=2-step "parallel" batch grid (v7x gets both TensorCores).
    out_fast = transformer_encoder_layer(x, mask, w, num_heads=H)

    # 3) One batch element per grid step (smallest VMEM footprint), f32 math,
    #    exercises the multi-step pipeline with single-buffered weights.
    out_b1 = transformer_encoder_layer(x, mask, w, num_heads=H, block_b=1,
                                       matmul_dtype=jnp.float32)

    jax.block_until_ready((out_f32, attnw, out_fast, out_b1))

    with jax.default_matmul_precision("highest"):
        ref_out, ref_p = reference(x, mask, w, num_heads=H)
        ref_out = jax.block_until_ready(ref_out)

    tol_f32 = dict(rtol=5e-3, atol=5e-3)
    tol_bf16 = dict(rtol=5e-2, atol=5e-2)   # bf16 MXU operand rounding
    np.testing.assert_allclose(np.asarray(out_f32), np.asarray(ref_out), **tol_f32)
    np.testing.assert_allclose(np.asarray(out_b1), np.asarray(ref_out), **tol_f32)
    np.testing.assert_allclose(np.asarray(attnw), np.asarray(ref_p), **tol_f32)
    np.testing.assert_allclose(np.asarray(out_fast), np.asarray(ref_out), **tol_bf16)

    print("KERNEL_OK")
</pallas_src>

<mosaic_0001>
module attributes {stable_mosaic.version = 11 : i64} {
  func.func @_encoder_layer_kernel(%arg0: i32, %arg1: memref<2x8x32xf32, #tpu.memory_space<vmem>>, %arg2: memref<2x1x1x8xf32, #tpu.memory_space<vmem>>, %arg3: memref<32x32xf32, #tpu.memory_space<vmem>>, %arg4: memref<1x32xf32, #tpu.memory_space<vmem>>, %arg5: memref<32x32xf32, #tpu.memory_space<vmem>>, %arg6: memref<1x32xf32, #tpu.memory_space<vmem>>, %arg7: memref<32x32xf32, #tpu.memory_space<vmem>>, %arg8: memref<1x32xf32, #tpu.memory_space<vmem>>, %arg9: memref<32x32xf32, #tpu.memory_space<vmem>>, %arg10: memref<1x32xf32, #tpu.memory_space<vmem>>, %arg11: memref<1x32xf32, #tpu.memory_space<vmem>>, %arg12: memref<1x32xf32, #tpu.memory_space<vmem>>, %arg13: memref<32x64xf32, #tpu.memory_space<vmem>>, %arg14: memref<1x64xf32, #tpu.memory_space<vmem>>, %arg15: memref<64x32xf32, #tpu.memory_space<vmem>>, %arg16: memref<1x32xf32, #tpu.memory_space<vmem>>, %arg17: memref<1x32xf32, #tpu.memory_space<vmem>>, %arg18: memref<1x32xf32, #tpu.memory_space<vmem>>, %arg19: memref<2x8x32xf32, #tpu.memory_space<vmem>>, %arg20: memref<2x8x32xf32, #tpu.memory_space<vmem>>) attributes {dimension_semantics = [#tpu.dimension_semantics<parallel>], iteration_bounds = array<i64: 1>, scalar_prefetch = 0 : i64, scratch_operands = 0 : i64, tpu.core_type = #tpu.core_type<tc>, window_params = [{transform_indices = @transform_0, window_bounds = array<i64: 2, 8, 32>}, {transform_indices = @transform_1, window_bounds = array<i64: 2, 1, 1, 8>}, {pipeline_mode = #tpu.pipeline_mode<synchronous>, transform_indices = @transform_2, window_bounds = array<i64: 32, 32>}, {pipeline_mode = #tpu.pipeline_mode<synchronous>, transform_indices = @transform_3, window_bounds = array<i64: 1, 32>}, {pipeline_mode = #tpu.pipeline_mode<synchronous>, transform_indices = @transform_4, window_bounds = array<i64: 32, 32>}, {pipeline_mode = #tpu.pipeline_mode<synchronous>, transform_indices = @transform_5, window_bounds = array<i64: 1, 32>}, {pipeline_mode = #tpu.pipeline_mode<synchronous>, transform_indices = @transform_6, window_bounds = array<i64: 32, 32>}, {pipeline_mode = #tpu.pipeline_mode<synchronous>, transform_indices = @transform_7, window_bounds = array<i64: 1, 32>}, {pipeline_mode = #tpu.pipeline_mode<synchronous>, transform_indices = @transform_8, window_bounds = array<i64: 32, 32>}, {pipeline_mode = #tpu.pipeline_mode<synchronous>, transform_indices = @transform_9, window_bounds = array<i64: 1, 32>}, {pipeline_mode = #tpu.pipeline_mode<synchronous>, transform_indices = @transform_10, window_bounds = array<i64: 1, 32>}, {pipeline_mode = #tpu.pipeline_mode<synchronous>, transform_indices = @transform_11, window_bounds = array<i64: 1, 32>}, {pipeline_mode = #tpu.pipeline_mode<synchronous>, transform_indices = @transform_12, window_bounds = array<i64: 32, 64>}, {pipeline_mode = #tpu.pipeline_mode<synchronous>, transform_indices = @transform_13, window_bounds = array<i64: 1, 64>}, {pipeline_mode = #tpu.pipeline_mode<synchronous>, transform_indices = @transform_14, window_bounds = array<i64: 64, 32>}, {pipeline_mode = #tpu.pipeline_mode<synchronous>, transform_indices = @transform_15, window_bounds = array<i64: 1, 32>}, {pipeline_mode = #tpu.pipeline_mode<synchronous>, transform_indices = @transform_16, window_bounds = array<i64: 1, 32>}, {pipeline_mode = #tpu.pipeline_mode<synchronous>, transform_indices = @transform_17, window_bounds = array<i64: 1, 32>}, {transform_indices = @transform_18, window_bounds = array<i64: 2, 8, 32>}, {transform_indices = @transform_19, window_bounds = array<i64: 2, 8, 32>}]} {
    %c0 = arith.constant 0 : index
    %c0_0 = arith.constant 0 : index
    %c0_1 = arith.constant 0 : index
    %0 = vector.load %arg1[%c0, %c0_0, %c0_1] : memref<2x8x32xf32, #tpu.memory_space<vmem>>, vector<2x8x32xf32>
    %1 = vector.shape_cast %0 : vector<2x8x32xf32> to vector<16x32xf32>
    %c0_2 = arith.constant 0 : index
    %c0_3 = arith.constant 0 : index
    %2 = vector.load %arg3[%c0_2, %c0_3] : memref<32x32xf32, #tpu.memory_space<vmem>>, vector<32x32xf32>
    %cst = arith.constant dense<0.000000e+00> : vector<16x32xf32>
    %3 = tpu.matmul %1, %2, %cst {dimension_numbers = #tpu.dot_dimension_numbers<[1], [0], [0], [1], [0, 0, 1, 1], [], []>} : vector<16x32xf32>, vector<32x32xf32>, vector<16x32xf32> -> vector<16x32xf32>
    %c0_4 = arith.constant 0 : index
    %c0_5 = arith.constant 0 : index
    %4 = vector.load %arg4[%c0_4, %c0_5] : memref<1x32xf32, #tpu.memory_space<vmem>>, vector<1x32xf32>
    %5 = vector.broadcast %4 : vector<1x32xf32> to vector<16x32xf32>
    %6 = arith.addf %3, %5 : vector<16x32xf32>
    %cst_6 = arith.constant 0.353553385 : f32
    %7 = vector.broadcast %cst_6 : f32 to vector<16x32xf32>
    %8 = arith.mulf %6, %7 : vector<16x32xf32>
    %9 = vector.shape_cast %8 : vector<16x32xf32> to vector<2x8x32xf32>
    %c0_7 = arith.constant 0 : index
    %c0_8 = arith.constant 0 : index
    %10 = vector.load %arg5[%c0_7, %c0_8] : memref<32x32xf32, #tpu.memory_space<vmem>>, vector<32x32xf32>
    %cst_9 = arith.constant dense<0.000000e+00> : vector<16x32xf32>
    %11 = tpu.matmul %1, %10, %cst_9 {dimension_numbers = #tpu.dot_dimension_numbers<[1], [0], [0], [1], [0, 0, 1, 1], [], []>} : vector<16x32xf32>, vector<32x32xf32>, vector<16x32xf32> -> vector<16x32xf32>
    %c0_10 = arith.constant 0 : index
    %c0_11 = arith.constant 0 : index
    %12 = vector.load %arg6[%c0_10, %c0_11] : memref<1x32xf32, #tpu.memory_space<vmem>>, vector<1x32xf32>
    %13 = vector.broadcast %12 : vector<1x32xf32> to vector<16x32xf32>
    %14 = arith.addf %11, %13 : vector<16x32xf32>
    %15 = vector.shape_cast %14 : vector<16x32xf32> to vector<2x8x32xf32>
    %c0_12 = arith.constant 0 : index
    %c0_13 = arith.constant 0 : index
    %16 = vector.load %arg7[%c0_12, %c0_13] : memref<32x32xf32, #tpu.memory_space<vmem>>, vector<32x32xf32>
    %cst_14 = arith.constant dense<0.000000e+00> : vector<16x32xf32>
    %17 = tpu.matmul %1, %16, %cst_14 {dimension_numbers = #tpu.dot_dimension_numbers<[1], [0], [0], [1], [0, 0, 1, 1], [], []>} : vector<16x32xf32>, vector<32x32xf32>, vector<16x32xf32> -> vector<16x32xf32>
    %c0_15 = arith.constant 0 : index
    %c0_16 = arith.constant 0 : index
    %18 = vector.load %arg8[%c0_15, %c0_16] : memref<1x32xf32, #tpu.memory_space<vmem>>, vector<1x32xf32>
    %19 = vector.broadcast %18 : vector<1x32xf32> to vector<16x32xf32>
    %20 = arith.addf %17, %19 : vector<16x32xf32>
    %21 = vector.shape_cast %20 : vector<16x32xf32> to vector<2x8x32xf32>
    %c0_17 = arith.constant 0 : index
    %c0_18 = arith.constant 0 : index
    %c0_19 = arith.constant 0 : index
    %c0_20 = arith.constant 0 : index
    %22 = vector.load %arg2[%c0_17, %c0_18, %c0_19, %c0_20] : memref<2x1x1x8xf32, #tpu.memory_space<vmem>>, vector<2x1x1x8xf32>
    %cst_21 = arith.constant -1.000000e+09 : f32
    %23 = vector.broadcast %cst_21 : f32 to vector<2x1x1x8xf32>
    %24 = arith.mulf %22, %23 : vector<2x1x1x8xf32>
    %25 = vector.shape_cast %24 : vector<2x1x1x8xf32> to vector<2x1x8xf32>
    %26 = vector.extract_strided_slice %9 {offsets = [0, 0, 0], sizes = [2, 8, 8], strides = [1, 1, 1]} : vector<2x8x32xf32> to vector<2x8x8xf32>
    %27 = vector.extract_strided_slice %15 {offsets = [0, 0, 0], sizes = [2, 8, 8], strides = [1, 1, 1]} : vector<2x8x32xf32> to vector<2x8x8xf32>
    %28 = vector.extract_strided_slice %21 {offsets = [0, 0, 0], sizes = [2, 8, 8], strides = [1, 1, 1]} : vector<2x8x32xf32> to vector<2x8x8xf32>
    "tpu.trace_start"() <{level = 10 : i32, message = "bqd,bkd->bqk"}> : () -> ()
    %cst_22 = arith.constant dense<0.000000e+00> : vector<2x8x8xf32>
    %29 = tpu.matmul %26, %27, %cst_22 {dimension_numbers = #tpu.dot_dimension_numbers<[2], [2], [1], [1], [0, 0, 0, 1, 1, 1], [0], [0]>} : vector<2x8x8xf32>, vector<2x8x8xf32>, vector<2x8x8xf32> -> vector<2x8x8xf32>
    "tpu.trace_stop"() : () -> ()
    %30 = vector.broadcast %25 : vector<2x1x8xf32> to vector<2x8x8xf32>
    %31 = arith.addf %29, %30 : vector<2x8x8xf32>
    %cst_23 = arith.constant dense<0xFF800000> : vector<2x8xf32>
    %32 = vector.multi_reduction <maximumf>, %31, %cst_23 [2] : vector<2x8x8xf32> to vector<2x8xf32>
    %33 = vector.shape_cast %32 : vector<2x8xf32> to vector<2x8x1xf32>
    %34 = vector.broadcast %33 : vector<2x8x1xf32> to vector<2x8x8xf32>
    %35 = arith.subf %31, %34 : vector<2x8x8xf32>
    %36 = math.exp %35 : vector<2x8x8xf32>
    %cst_24 = arith.constant dense<0.000000e+00> : vector<2x8xf32>
    %37 = vector.multi_reduction <add>, %36, %cst_24 [2] : vector<2x8x8xf32> to vector<2x8xf32>
    %38 = vector.shape_cast %37 : vector<2x8xf32> to vector<2x8x1xf32>
    %39 = vector.broadcast %38 : vector<2x8x1xf32> to vector<2x8x8xf32>
    %40 = arith.divf %36, %39 : vector<2x8x8xf32>
    %c0_25 = arith.constant 0 : index
    %c0_26 = arith.constant 0 : index
    %c0_27 = arith.constant 0 : index
    %41 = vector.load %arg20[%c0_25, %c0_26, %c0_27] : memref<2x8x32xf32, #tpu.memory_space<vmem>>, vector<2x8x8xf32>
    tpu.vector_store %arg20[%c0_25, %c0_26, %c0_27], %40 {strides = array<i32>} : memref<2x8x32xf32, #tpu.memory_space<vmem>>, vector<2x8x8xf32>,
    "tpu.trace_start"() <{level = 10 : i32, message = "bqk,bkd->bqd"}> : () -> ()
    %cst_28 = arith.constant dense<0.000000e+00> : vector<2x8x8xf32>
    %42 = tpu.matmul %40, %28, %cst_28 {dimension_numbers = #tpu.dot_dimension_numbers<[2], [1], [1], [2], [0, 0, 0, 1, 1, 2], [0], [0]>} : vector<2x8x8xf32>, vector<2x8x8xf32>, vector<2x8x8xf32> -> vector<2x8x8xf32>
    "tpu.trace_stop"() : () -> ()
    %43 = vector.extract_strided_slice %9 {offsets = [0, 0, 8], sizes = [2, 8, 8], strides = [1, 1, 1]} : vector<2x8x32xf32> to vector<2x8x8xf32>
    %44 = vector.extract_strided_slice %15 {offsets = [0, 0, 8], sizes = [2, 8, 8], strides = [1, 1, 1]} : vector<2x8x32xf32> to vector<2x8x8xf32>
    %45 = vector.extract_strided_slice %21 {offsets = [0, 0, 8], sizes = [2, 8, 8], strides = [1, 1, 1]} : vector<2x8x32xf32> to vector<2x8x8xf32>
    "tpu.trace_start"() <{level = 10 : i32, message = "bqd,bkd->bqk"}> : () -> ()
    %cst_29 = arith.constant dense<0.000000e+00> : vector<2x8x8xf32>
    %46 = tpu.matmul %43, %44, %cst_29 {dimension_numbers = #tpu.dot_dimension_numbers<[2], [2], [1], [1], [0, 0, 0, 1, 1, 1], [0], [0]>} : vector<2x8x8xf32>, vector<2x8x8xf32>, vector<2x8x8xf32> -> vector<2x8x8xf32>
    "tpu.trace_stop"() : () -> ()
    %47 = vector.broadcast %25 : vector<2x1x8xf32> to vector<2x8x8xf32>
    %48 = arith.addf %46, %47 : vector<2x8x8xf32>
    %cst_30 = arith.constant dense<0xFF800000> : vector<2x8xf32>
    %49 = vector.multi_reduction <maximumf>, %48, %cst_30 [2] : vector<2x8x8xf32> to vector<2x8xf32>
    %50 = vector.shape_cast %49 : vector<2x8xf32> to vector<2x8x1xf32>
    %51 = vector.broadcast %50 : vector<2x8x1xf32> to vector<2x8x8xf32>
    %52 = arith.subf %48, %51 : vector<2x8x8xf32>
    %53 = math.exp %52 : vector<2x8x8xf32>
    %cst_31 = arith.constant dense<0.000000e+00> : vector<2x8xf32>
    %54 = vector.multi_reduction <add>, %53, %cst_31 [2] : vector<2x8x8xf32> to vector<2x8xf32>
    %55 = vector.shape_cast %54 : vector<2x8xf32> to vector<2x8x1xf32>
    %56 = vector.broadcast %55 : vector<2x8x1xf32> to vector<2x8x8xf32>
    %57 = arith.divf %53, %56 : vector<2x8x8xf32>
    %c0_32 = arith.constant 0 : index
    %c0_33 = arith.constant 0 : index
    %c8 = arith.constant 8 : index
    %58 = vector.load %arg20[%c0_32, %c0_33, %c8] : memref<2x8x32xf32, #tpu.memory_space<vmem>>, vector<2x8x8xf32>
    tpu.vector_store %arg20[%c0_32, %c0_33, %c8], %57 {strides = array<i32>} : memref<2x8x32xf32, #tpu.memory_space<vmem>>, vector<2x8x8xf32>,
    "tpu.trace_start"() <{level = 10 : i32, message = "bqk,bkd->bqd"}> : () -> ()
    %cst_34 = arith.constant dense<0.000000e+00> : vector<2x8x8xf32>
    %59 = tpu.matmul %57, %45, %cst_34 {dimension_numbers = #tpu.dot_dimension_numbers<[2], [1], [1], [2], [0, 0, 0, 1, 1, 2], [0], [0]>} : vector<2x8x8xf32>, vector<2x8x8xf32>, vector<2x8x8xf32> -> vector<2x8x8xf32>
    "tpu.trace_stop"() : () -> ()
    %60 = vector.extract_strided_slice %9 {offsets = [0, 0, 16], sizes = [2, 8, 8], strides = [1, 1, 1]} : vector<2x8x32xf32> to vector<2x8x8xf32>
    %61 = vector.extract_strided_slice %15 {offsets = [0, 0, 16], sizes = [2, 8, 8], strides = [1, 1, 1]} : vector<2x8x32xf32> to vector<2x8x8xf32>
    %62 = vector.extract_strided_slice %21 {offsets = [0, 0, 16], sizes = [2, 8, 8], strides = [1, 1, 1]} : vector<2x8x32xf32> to vector<2x8x8xf32>
    "tpu.trace_start"() <{level = 10 : i32, message = "bqd,bkd->bqk"}> : () -> ()
    %cst_35 = arith.constant dense<0.000000e+00> : vector<2x8x8xf32>
    %63 = tpu.matmul %60, %61, %cst_35 {dimension_numbers = #tpu.dot_dimension_numbers<[2], [2], [1], [1], [0, 0, 0, 1, 1, 1], [0], [0]>} : vector<2x8x8xf32>, vector<2x8x8xf32>, vector<2x8x8xf32> -> vector<2x8x8xf32>
    "tpu.trace_stop"() : () -> ()
    %64 = vector.broadcast %25 : vector<2x1x8xf32> to vector<2x8x8xf32>
    %65 = arith.addf %63, %64 : vector<2x8x8xf32>
    %cst_36 = arith.constant dense<0xFF800000> : vector<2x8xf32>
    %66 = vector.multi_reduction <maximumf>, %65, %cst_36 [2] : vector<2x8x8xf32> to vector<2x8xf32>
    %67 = vector.shape_cast %66 : vector<2x8xf32> to vector<2x8x1xf32>
    %68 = vector.broadcast %67 : vector<2x8x1xf32> to vector<2x8x8xf32>
    %69 = arith.subf %65, %68 : vector<2x8x8xf32>
    %70 = math.exp %69 : vector<2x8x8xf32>
    %cst_37 = arith.constant dense<0.000000e+00> : vector<2x8xf32>
    %71 = vector.multi_reduction <add>, %70, %cst_37 [2] : vector<2x8x8xf32> to vector<2x8xf32>
    %72 = vector.shape_cast %71 : vector<2x8xf32> to vector<2x8x1xf32>
    %73 = vector.broadcast %72 : vector<2x8x1xf32> to vector<2x8x8xf32>
    %74 = arith.divf %70, %73 : vector<2x8x8xf32>
    %c0_38 = arith.constant 0 : index
    %c0_39 = arith.constant 0 : index
    %c16 = arith.constant 16 : index
    %75 = vector.load %arg20[%c0_38, %c0_39, %c16] : memref<2x8x32xf32, #tpu.memory_space<vmem>>, vector<2x8x8xf32>
    tpu.vector_store %arg20[%c0_38, %c0_39, %c16], %74 {strides = array<i32>} : memref<2x8x32xf32, #tpu.memory_space<vmem>>, vector<2x8x8xf32>,
    "tpu.trace_start"() <{level = 10 : i32, message = "bqk,bkd->bqd"}> : () -> ()
    %cst_40 = arith.constant dense<0.000000e+00> : vector<2x8x8xf32>
    %76 = tpu.matmul %74, %62, %cst_40 {dimension_numbers = #tpu.dot_dimension_numbers<[2], [1], [1], [2], [0, 0, 0, 1, 1, 2], [0], [0]>} : vector<2x8x8xf32>, vector<2x8x8xf32>, vector<2x8x8xf32> -> vector<2x8x8xf32>
    "tpu.trace_stop"() : () -> ()
    %77 = vector.extract_strided_slice %9 {offsets = [0, 0, 24], sizes = [2, 8, 8], strides = [1, 1, 1]} : vector<2x8x32xf32> to vector<2x8x8xf32>
    %78 = vector.extract_strided_slice %15 {offsets = [0, 0, 24], sizes = [2, 8, 8], strides = [1, 1, 1]} : vector<2x8x32xf32> to vector<2x8x8xf32>
    %79 = vector.extract_strided_slice %21 {offsets = [0, 0, 24], sizes = [2, 8, 8], strides = [1, 1, 1]} : vector<2x8x32xf32> to vector<2x8x8xf32>
    "tpu.trace_start"() <{level = 10 : i32, message = "bqd,bkd->bqk"}> : () -> ()
    %cst_41 = arith.constant dense<0.000000e+00> : vector<2x8x8xf32>
    %80 = tpu.matmul %77, %78, %cst_41 {dimension_numbers = #tpu.dot_dimension_numbers<[2], [2], [1], [1], [0, 0, 0, 1, 1, 1], [0], [0]>} : vector<2x8x8xf32>, vector<2x8x8xf32>, vector<2x8x8xf32> -> vector<2x8x8xf32>
    "tpu.trace_stop"() : () -> ()
    %81 = vector.broadcast %25 : vector<2x1x8xf32> to vector<2x8x8xf32>
    %82 = arith.addf %80, %81 : vector<2x8x8xf32>
    %cst_42 = arith.constant dense<0xFF800000> : vector<2x8xf32>
    %83 = vector.multi_reduction <maximumf>, %82, %cst_42 [2] : vector<2x8x8xf32> to vector<2x8xf32>
    %84 = vector.shape_cast %83 : vector<2x8xf32> to vector<2x8x1xf32>
    %85 = vector.broadcast %84 : vector<2x8x1xf32> to vector<2x8x8xf32>
    %86 = arith.subf %82, %85 : vector<2x8x8xf32>
    %87 = math.exp %86 : vector<2x8x8xf32>
    %cst_43 = arith.constant dense<0.000000e+00> : vector<2x8xf32>
    %88 = vector.multi_reduction <add>, %87, %cst_43 [2] : vector<2x8x8xf32> to vector<2x8xf32>
    %89 = vector.shape_cast %88 : vector<2x8xf32> to vector<2x8x1xf32>
    %90 = vector.broadcast %89 : vector<2x8x1xf32> to vector<2x8x8xf32>
    %91 = arith.divf %87, %90 : vector<2x8x8xf32>
    %c0_44 = arith.constant 0 : index
    %c0_45 = arith.constant 0 : index
    %c24 = arith.constant 24 : index
    %92 = vector.load %arg20[%c0_44, %c0_45, %c24] : memref<2x8x32xf32, #tpu.memory_space<vmem>>, vector<2x8x8xf32>
    tpu.vector_store %arg20[%c0_44, %c0_45, %c24], %91 {strides = array<i32>} : memref<2x8x32xf32, #tpu.memory_space<vmem>>, vector<2x8x8xf32>,
    "tpu.trace_start"() <{level = 10 : i32, message = "bqk,bkd->bqd"}> : () -> ()
    %cst_46 = arith.constant dense<0.000000e+00> : vector<2x8x8xf32>
    %93 = tpu.matmul %91, %79, %cst_46 {dimension_numbers = #tpu.dot_dimension_numbers<[2], [1], [1], [2], [0, 0, 0, 1, 1, 2], [0], [0]>} : vector<2x8x8xf32>, vector<2x8x8xf32>, vector<2x8x8xf32> -> vector<2x8x8xf32>
    "tpu.trace_stop"() : () -> ()
    %94 = tpu.concatenate %42, %59, %76, %93 in 2 : vector<2x8x8xf32>, vector<2x8x8xf32>, vector<2x8x8xf32>, vector<2x8x8xf32> -> vector<2x8x32xf32>
    %95 = vector.shape_cast %94 : vector<2x8x32xf32> to vector<16x32xf32>
    %c0_47 = arith.constant 0 : index
    %c0_48 = arith.constant 0 : index
    %96 = vector.load %arg9[%c0_47, %c0_48] : memref<32x32xf32, #tpu.memory_space<vmem>>, vector<32x32xf32>
    %cst_49 = arith.constant dense<0.000000e+00> : vector<16x32xf32>
    %97 = tpu.matmul %95, %96, %cst_49 {dimension_numbers = #tpu.dot_dimension_numbers<[1], [0], [0], [1], [0, 0, 1, 1], [], []>} : vector<16x32xf32>, vector<32x32xf32>, vector<16x32xf32> -> vector<16x32xf32>
    %c0_50 = arith.constant 0 : index
    %c0_51 = arith.constant 0 : index
    %98 = vector.load %arg10[%c0_50, %c0_51] : memref<1x32xf32, #tpu.memory_space<vmem>>, vector<1x32xf32>
    %99 = vector.broadcast %98 : vector<1x32xf32> to vector<16x32xf32>
    %100 = arith.addf %97, %99 : vector<16x32xf32>
    %101 = arith.addf %100, %1 : vector<16x32xf32>
    %c0_52 = arith.constant 0 : index
    %c0_53 = arith.constant 0 : index
    %102 = vector.load %arg11[%c0_52, %c0_53] : memref<1x32xf32, #tpu.memory_space<vmem>>, vector<1x32xf32>
    %c0_54 = arith.constant 0 : index
    %c0_55 = arith.constant 0 : index
    %103 = vector.load %arg12[%c0_54, %c0_55] : memref<1x32xf32, #tpu.memory_space<vmem>>, vector<1x32xf32>
    %cst_56 = arith.constant dense<0.000000e+00> : vector<16xf32>
    %104 = vector.multi_reduction <add>, %101, %cst_56 [1] : vector<16x32xf32> to vector<16xf32>
    %105 = vector.shape_cast %104 : vector<16xf32> to vector<16x1xf32>
    %cst_57 = arith.constant 3.200000e+01 : f32
    %106 = vector.broadcast %cst_57 : f32 to vector<16x1xf32>
    %107 = arith.divf %105, %106 : vector<16x1xf32>
    %108 = vector.broadcast %107 : vector<16x1xf32> to vector<16x32xf32>
    %109 = arith.subf %101, %108 : vector<16x32xf32>
    %110 = arith.mulf %109, %109 : vector<16x32xf32>
    %cst_58 = arith.constant dense<0.000000e+00> : vector<16xf32>
    %111 = vector.multi_reduction <add>, %110, %cst_58 [1] : vector<16x32xf32> to vector<16xf32>
    %112 = vector.shape_cast %111 : vector<16xf32> to vector<16x1xf32>
    %cst_59 = arith.constant 3.200000e+01 : f32
    %113 = vector.broadcast %cst_59 : f32 to vector<16x1xf32>
    %114 = arith.divf %112, %113 : vector<16x1xf32>
    %115 = vector.broadcast %107 : vector<16x1xf32> to vector<16x32xf32>
    %116 = arith.subf %101, %115 : vector<16x32xf32>
    %cst_60 = arith.constant 9.99999974E-6 : f32
    %117 = vector.broadcast %cst_60 : f32 to vector<16x1xf32>
    %118 = arith.addf %114, %117 : vector<16x1xf32>
    %119 = math.rsqrt %118 : vector<16x1xf32>
    %120 = vector.broadcast %119 : vector<16x1xf32> to vector<16x32xf32>
    %121 = arith.mulf %116, %120 : vector<16x32xf32>
    %122 = vector.broadcast %102 : vector<1x32xf32> to vector<16x32xf32>
    %123 = arith.mulf %121, %122 : vector<16x32xf32>
    %124 = vector.broadcast %103 : vector<1x32xf32> to vector<16x32xf32>
    %125 = arith.addf %123, %124 : vector<16x32xf32>
    %c0_61 = arith.constant 0 : index
    %c0_62 = arith.constant 0 : index
    %126 = vector.load %arg13[%c0_61, %c0_62] : memref<32x64xf32, #tpu.memory_space<vmem>>, vector<32x64xf32>
    %cst_63 = arith.constant dense<0.000000e+00> : vector<16x64xf32>
    %127 = tpu.matmul %125, %126, %cst_63 {dimension_numbers = #tpu.dot_dimension_numbers<[1], [0], [0], [1], [0, 0, 1, 1], [], []>} : vector<16x32xf32>, vector<32x64xf32>, vector<16x64xf32> -> vector<16x64xf32>
    %c0_64 = arith.constant 0 : index
    %c0_65 = arith.constant 0 : index
    %128 = vector.load %arg14[%c0_64, %c0_65] : memref<1x64xf32, #tpu.memory_space<vmem>>, vector<1x64xf32>
    %129 = vector.broadcast %128 : vector<1x64xf32> to vector<16x64xf32>
    %130 = arith.addf %127, %129 : vector<16x64xf32>
    %cst_66 = arith.constant 0.000000e+00 : f32
    %131 = vector.broadcast %cst_66 : f32 to vector<16x64xf32>
    %132 = arith.maximumf %130, %131 : vector<16x64xf32>
    %c0_67 = arith.constant 0 : index
    %c0_68 = arith.constant 0 : index
    %133 = vector.load %arg15[%c0_67, %c0_68] : memref<64x32xf32, #tpu.memory_space<vmem>>, vector<64x32xf32>
    %cst_69 = arith.constant dense<0.000000e+00> : vector<16x32xf32>
    %134 = tpu.matmul %132, %133, %cst_69 {dimension_numbers = #tpu.dot_dimension_numbers<[1], [0], [0], [1], [0, 0, 1, 1], [], []>} : vector<16x64xf32>, vector<64x32xf32>, vector<16x32xf32> -> vector<16x32xf32>
    %c0_70 = arith.constant 0 : index
    %c0_71 = arith.constant 0 : index
    %135 = vector.load %arg16[%c0_70, %c0_71] : memref<1x32xf32, #tpu.memory_space<vmem>>, vector<1x32xf32>
    %136 = vector.broadcast %135 : vector<1x32xf32> to vector<16x32xf32>
    %137 = arith.addf %134, %136 : vector<16x32xf32>
    %138 = arith.addf %137, %125 : vector<16x32xf32>
    %c0_72 = arith.constant 0 : index
    %c0_73 = arith.constant 0 : index
    %139 = vector.load %arg17[%c0_72, %c0_73] : memref<1x32xf32, #tpu.memory_space<vmem>>, vector<1x32xf32>
    %c0_74 = arith.constant 0 : index
    %c0_75 = arith.constant 0 : index
    %140 = vector.load %arg18[%c0_74, %c0_75] : memref<1x32xf32, #tpu.memory_space<vmem>>, vector<1x32xf32>
    %cst_76 = arith.constant dense<0.000000e+00> : vector<16xf32>
    %141 = vector.multi_reduction <add>, %138, %cst_76 [1] : vector<16x32xf32> to vector<16xf32>
    %142 = vector.shape_cast %141 : vector<16xf32> to vector<16x1xf32>
    %cst_77 = arith.constant 3.200000e+01 : f32
    %143 = vector.broadcast %cst_77 : f32 to vector<16x1xf32>
    %144 = arith.divf %142, %143 : vector<16x1xf32>
    %145 = vector.broadcast %144 : vector<16x1xf32> to vector<16x32xf32>
    %146 = arith.subf %138, %145 : vector<16x32xf32>
    %147 = arith.mulf %146, %146 : vector<16x32xf32>
    %cst_78 = arith.constant dense<0.000000e+00> : vector<16xf32>
    %148 = vector.multi_reduction <add>, %147, %cst_78 [1] : vector<16x32xf32> to vector<16xf32>
    %149 = vector.shape_cast %148 : vector<16xf32> to vector<16x1xf32>
    %cst_79 = arith.constant 3.200000e+01 : f32
    %150 = vector.broadcast %cst_79 : f32 to vector<16x1xf32>
    %151 = arith.divf %149, %150 : vector<16x1xf32>
    %152 = vector.broadcast %144 : vector<16x1xf32> to vector<16x32xf32>
    %153 = arith.subf %138, %152 : vector<16x32xf32>
    %cst_80 = arith.constant 9.99999974E-6 : f32
    %154 = vector.broadcast %cst_80 : f32 to vector<16x1xf32>
    %155 = arith.addf %151, %154 : vector<16x1xf32>
    %156 = math.rsqrt %155 : vector<16x1xf32>
    %157 = vector.broadcast %156 : vector<16x1xf32> to vector<16x32xf32>
    %158 = arith.mulf %153, %157 : vector<16x32xf32>
    %159 = vector.broadcast %139 : vector<1x32xf32> to vector<16x32xf32>
    %160 = arith.mulf %158, %159 : vector<16x32xf32>
    %161 = vector.broadcast %140 : vector<1x32xf32> to vector<16x32xf32>
    %162 = arith.addf %160, %161 : vector<16x32xf32>
    %163 = vector.shape_cast %162 : vector<16x32xf32> to vector<2x8x32xf32>
    %c0_81 = arith.constant 0 : index
    %c0_82 = arith.constant 0 : index
    %c0_83 = arith.constant 0 : index
    %164 = vector.load %arg19[%c0_81, %c0_82, %c0_83] : memref<2x8x32xf32, #tpu.memory_space<vmem>>, vector<2x8x32xf32>
    tpu.vector_store %arg19[%c0_81, %c0_82, %c0_83], %163 {strides = array<i32>} : memref<2x8x32xf32, #tpu.memory_space<vmem>>, vector<2x8x32xf32>,
    return
  }
  func.func @transform_0(%arg0: i32) -> (i32, i32, i32) {
    %c0_i32 = arith.constant 0 : i32
    %c0_i32_0 = arith.constant 0 : i32
    %c0_i32_1 = arith.constant 0 : i32
    return %arg0, %c0_i32, %c0_i32_0 : i32, i32, i32
  }
  func.func @transform_1(%arg0: i32) -> (i32, i32, i32, i32) {
    %c0_i32 = arith.constant 0 : i32
    %c0_i32_0 = arith.constant 0 : i32
    %c0_i32_1 = arith.constant 0 : i32
    %c0_i32_2 = arith.constant 0 : i32
    return %arg0, %c0_i32, %c0_i32_0, %c0_i32_1 : i32, i32, i32, i32
  }
  func.func @transform_2(%arg0: i32) -> (i32, i32) {
    %c0_i32 = arith.constant 0 : i32
    %c0_i32_0 = arith.constant 0 : i32
    %c0_i32_1 = arith.constant 0 : i32
    return %c0_i32, %c0_i32_0 : i32, i32
  }
  func.func @transform_3(%arg0: i32) -> (i32, i32) {
    %c0_i32 = arith.constant 0 : i32
    %c0_i32_0 = arith.constant 0 : i32
    %c0_i32_1 = arith.constant 0 : i32
    return %c0_i32, %c0_i32_0 : i32, i32
  }
  func.func @transform_4(%arg0: i32) -> (i32, i32) {
    %c0_i32 = arith.constant 0 : i32
    %c0_i32_0 = arith.constant 0 : i32
    %c0_i32_1 = arith.constant 0 : i32
    return %c0_i32, %c0_i32_0 : i32, i32
  }
  func.func @transform_5(%arg0: i32) -> (i32, i32) {
    %c0_i32 = arith.constant 0 : i32
    %c0_i32_0 = arith.constant 0 : i32
    %c0_i32_1 = arith.constant 0 : i32
    return %c0_i32, %c0_i32_0 : i32, i32
  }
  func.func @transform_6(%arg0: i32) -> (i32, i32) {
    %c0_i32 = arith.constant 0 : i32
    %c0_i32_0 = arith.constant 0 : i32
    %c0_i32_1 = arith.constant 0 : i32
    return %c0_i32, %c0_i32_0 : i32, i32
  }
  func.func @transform_7(%arg0: i32) -> (i32, i32) {
    %c0_i32 = arith.constant 0 : i32
    %c0_i32_0 = arith.constant 0 : i32
    %c0_i32_1 = arith.constant 0 : i32
    return %c0_i32, %c0_i32_0 : i32, i32
  }
  func.func @transform_8(%arg0: i32) -> (i32, i32) {
    %c0_i32 = arith.constant 0 : i32
    %c0_i32_0 = arith.constant 0 : i32
    %c0_i32_1 = arith.constant 0 : i32
    return %c0_i32, %c0_i32_0 : i32, i32
  }
  func.func @transform_9(%arg0: i32) -> (i32, i32) {
    %c0_i32 = arith.constant 0 : i32
    %c0_i32_0 = arith.constant 0 : i32
    %c0_i32_1 = arith.constant 0 : i32
    return %c0_i32, %c0_i32_0 : i32, i32
  }
  func.func @transform_10(%arg0: i32) -> (i32, i32) {
    %c0_i32 = arith.constant 0 : i32
    %c0_i32_0 = arith.constant 0 : i32
    %c0_i32_1 = arith.constant 0 : i32
    return %c0_i32, %c0_i32_0 : i32, i32
  }
  func.func @transform_11(%arg0: i32) -> (i32, i32) {
    %c0_i32 = arith.constant 0 : i32
    %c0_i32_0 = arith.constant 0 : i32
    %c0_i32_1 = arith.constant 0 : i32
    return %c0_i32, %c0_i32_0 : i32, i32
  }
  func.func @transform_12(%arg0: i32) -> (i32, i32) {
    %c0_i32 = arith.constant 0 : i32
    %c0_i32_0 = arith.constant 0 : i32
    %c0_i32_1 = arith.constant 0 : i32
    return %c0_i32, %c0_i32_0 : i32, i32
  }
  func.func @transform_13(%arg0: i32) -> (i32, i32) {
    %c0_i32 = arith.constant 0 : i32
    %c0_i32_0 = arith.constant 0 : i32
    %c0_i32_1 = arith.constant 0 : i32
    return %c0_i32, %c0_i32_0 : i32, i32
  }
  func.func @transform_14(%arg0: i32) -> (i32, i32) {
    %c0_i32 = arith.constant 0 : i32
    %c0_i32_0 = arith.constant 0 : i32
    %c0_i32_1 = arith.constant 0 : i32
    return %c0_i32, %c0_i32_0 : i32, i32
  }
  func.func @transform_15(%arg0: i32) -> (i32, i32) {
    %c0_i32 = arith.constant 0 : i32
    %c0_i32_0 = arith.constant 0 : i32
    %c0_i32_1 = arith.constant 0 : i32
    return %c0_i32, %c0_i32_0 : i32, i32
  }
  func.func @transform_16(%arg0: i32) -> (i32, i32) {
    %c0_i32 = arith.constant 0 : i32
    %c0_i32_0 = arith.constant 0 : i32
    %c0_i32_1 = arith.constant 0 : i32
    return %c0_i32, %c0_i32_0 : i32, i32
  }
  func.func @transform_17(%arg0: i32) -> (i32, i32) {
    %c0_i32 = arith.constant 0 : i32
    %c0_i32_0 = arith.constant 0 : i32
    %c0_i32_1 = arith.constant 0 : i32
    return %c0_i32, %c0_i32_0 : i32, i32
  }
  func.func @transform_18(%arg0: i32) -> (i32, i32, i32) {
    %c0_i32 = arith.constant 0 : i32
    %c0_i32_0 = arith.constant 0 : i32
    %c0_i32_1 = arith.constant 0 : i32
    return %arg0, %c0_i32, %c0_i32_0 : i32, i32, i32
  }
  func.func @transform_19(%arg0: i32) -> (i32, i32, i32) {
    %c0_i32 = arith.constant 0 : i32
    %c0_i32_0 = arith.constant 0 : i32
    %c0_i32_1 = arith.constant 0 : i32
    return %arg0, %c0_i32, %c0_i32_0 : i32, i32, i32
  }
}

</mosaic_0001>

<llo_original>
// kernel: tpu_custom_call.1
$region0: #{tpu_custom_call.1}
  #allocation0 [shape = 'u32[]', space=smem, size = 0x4, offset = 0x4, fixed_abs, tag = 'smem constant byte address 0x4 - core index']
  #allocation1 [shape = 'u32[144,128]{1,0:T(1,128)}', space=vmem, size = 0x12000, scoped, tag = 'internal scratch']
  %s0 = inlined_call_operand.hbm [shape: f32[2,8,32], index: 0, kind: input, shape index: {}]
  %s1 = inlined_call_operand.vmem [shape: f32[2,1,1,8], index: 1, kind: input, shape index: {}]
  %s2 = inlined_call_operand.vmem [shape: f32[32,32], index: 2, kind: input, shape index: {}]
  %s3 = inlined_call_operand.vmem [shape: f32[1,32], index: 3, kind: input, shape index: {}]
  %s4 = inlined_call_operand.vmem [shape: f32[32,32], index: 4, kind: input, shape index: {}]
  %s5 = inlined_call_operand.vmem [shape: f32[1,32], index: 5, kind: input, shape index: {}]
  %s6 = inlined_call_operand.vmem [shape: f32[32,32], index: 6, kind: input, shape index: {}]
  %s7 = inlined_call_operand.vmem [shape: f32[1,32], index: 7, kind: input, shape index: {}]
  %s8 = inlined_call_operand.hbm [shape: f32[32,32], index: 8, kind: input, shape index: {}]
  %s9 = inlined_call_operand.vmem [shape: f32[1,32], index: 9, kind: input, shape index: {}]
  %s10 = inlined_call_operand.vmem [shape: f32[1,32], index: 10, kind: input, shape index: {}]
  %s11 = inlined_call_operand.vmem [shape: f32[1,32], index: 11, kind: input, shape index: {}]
  %s12 = inlined_call_operand.hbm [shape: f32[32,64], index: 12, kind: input, shape index: {}]
  %s13 = inlined_call_operand.vmem [shape: f32[1,64], index: 13, kind: input, shape index: {}]
  %s14 = inlined_call_operand.vmem [shape: f32[64,32], index: 14, kind: input, shape index: {}]
  %s15 = inlined_call_operand.vmem [shape: f32[1,32], index: 15, kind: input, shape index: {}]
  %s16 = inlined_call_operand.vmem [shape: f32[1,32], index: 16, kind: input, shape index: {}]
  %s17 = inlined_call_operand.vmem [shape: f32[1,32], index: 17, kind: input, shape index: {}]
  %s18 = inlined_call_operand.hbm [shape: f32[2,8,32], index: 18, kind: output, shape index: {0}]
  %s19 = inlined_call_operand.hbm [shape: f32[2,8,32], index: 19, kind: output, shape index: {1}]
  %20 = xla_tuple %s18, %s19
  %s21 = sld [smem:[#allocation0]]
  $region102: #{tpu_custom_call.1} parent=0
    _
  %s23 = ssub.s32 1, %s21
  %s24 = scalar_select 0, %s23, %s21
  $region1: #{tpu_custom_call.1} parent=0
    #allocation2 [shape = 'u8[8192]{0}', space=vmem, size = 0x2000, scoped, tag = 'input window, operand 0, single buffered']
    #allocation3 [shape = 's32[1]{0}', space=sflag, size = 0x4, scoped, tag = 'scoped memory for tpu_custom_call.1']
    #allocation4 [shape = 's32[1]{0}', space=sflag, size = 0x4, scoped, tag = 'scoped memory for tpu_custom_call.1']
    #allocation5 [shape = 'u8[16384]{0}', space=vmem, size = 0x4000, scoped, tag = 'input window, operand 8, single buffered']
    #allocation6 [shape = 's32[1]{0}', space=sflag, size = 0x4, scoped, tag = 'scoped memory for tpu_custom_call.1']
    #allocation7 [shape = 'u8[16384]{0}', space=vmem, size = 0x4000, scoped, tag = 'input window, operand 12, single buffered']
    #allocation8 [shape = 'u8[8192]{0}', space=vmem, size = 0x2000, scoped, tag = 'output window, operand 0, single buffered']
    #allocation9 [shape = 'u8[8192]{0}', space=vmem, size = 0x2000, scoped, tag = 'output window, operand 1, single buffered']
    #allocation10 [shape = 's32[1]{0}', space=sflag, size = 0x4, scoped, tag = 'scoped memory for tpu_custom_call.1']
    %25 = vsyncpa [#allocation3], 0
    %26 = vsyncpa [#allocation6], 0
    %27 = vsyncpa [#allocation4], 0
    %28 = vsyncpa [#allocation10], 0
    // Predicated region
    $region2: #{tpu_custom_call.1} parent=1 // pred_check
      _
    $region3: #{tpu_custom_call.1} parent=1 // pred_check_branch
      %30 = sbr.rel (0) target = $region5
    $region4: #{tpu_custom_call.1} parent=1 // pred_region
      %s32 = ssub.s32 256, 256
      %33 = vsyncadd [#allocation3], %s32
      %s34 = sshll.u32 [#allocation2], 4
      %s35 = int_to_ptr.vmem [resolvable:$true] %s34
      %40 = dma.hbm_to_vmem [thread:$0]  %s0, 256, %s35, [#allocation3], 128, 128, 8
    $region5: #{tpu_custom_call.1} parent=1 // pred_fallthru
      _
    // Predicated region
    $region6: #{tpu_custom_call.1} parent=1 // pred_check
      _
    $region7: #{tpu_custom_call.1} parent=1 // pred_check_branch
      %42 = sbr.rel (0) target = $region9
    $region8: #{tpu_custom_call.1} parent=1 // pred_region
      _
    $region9: #{tpu_custom_call.1} parent=1 // pred_fallthru
      _
    // Predicated region
    $region10: #{tpu_custom_call.1} parent=1 // pred_check
      _
    $region11: #{tpu_custom_call.1} parent=1 // pred_check_branch
      %44 = sbr.rel (0) target = $region13
    $region12: #{tpu_custom_call.1} parent=1 // pred_region
      _
    $region13: #{tpu_custom_call.1} parent=1 // pred_fallthru
      _
    // Predicated region
    $region14: #{tpu_custom_call.1} parent=1 // pred_check
      _
    $region15: #{tpu_custom_call.1} parent=1 // pred_check_branch
      %46 = sbr.rel (0) target = $region17
    $region16: #{tpu_custom_call.1} parent=1 // pred_region
      _
    $region17: #{tpu_custom_call.1} parent=1 // pred_fallthru
      _
    // Predicated region
    $region18: #{tpu_custom_call.1} parent=1 // pred_check
      _
    $region19: #{tpu_custom_call.1} parent=1 // pred_check_branch
      %48 = sbr.rel (0) target = $region21
    $region20: #{tpu_custom_call.1} parent=1 // pred_region
      _
    $region21: #{tpu_custom_call.1} parent=1 // pred_fallthru
      _
    // Predicated region
    $region22: #{tpu_custom_call.1} parent=1 // pred_check
      _
    $region23: #{tpu_custom_call.1} parent=1 // pred_check_branch
      %50 = sbr.rel (0) target = $region25
    $region24: #{tpu_custom_call.1} parent=1 // pred_region
      _
    $region25: #{tpu_custom_call.1} parent=1 // pred_fallthru
      _
    // Predicated region
    $region26: #{tpu_custom_call.1} parent=1 // pred_check
      _
    $region27: #{tpu_custom_call.1} parent=1 // pred_check_branch
      %52 = sbr.rel (0) target = $region29
    $region28: #{tpu_custom_call.1} parent=1 // pred_region
      _
    $region29: #{tpu_custom_call.1} parent=1 // pred_fallthru
      _
    // Predicated region
    $region30: #{tpu_custom_call.1} parent=1 // pred_check
      _
    $region31: #{tpu_custom_call.1} parent=1 // pred_check_branch
      %54 = sbr.rel (0) target = $region33
    $region32: #{tpu_custom_call.1} parent=1 // pred_region
      _
    $region33: #{tpu_custom_call.1} parent=1 // pred_fallthru
      _
    // Predicated region
    $region34: #{tpu_custom_call.1} parent=1 // pred_check
      _
    $region35: #{tpu_custom_call.1} parent=1 // pred_check_branch
      %56 = sbr.rel (0) target = $region37
    $region36: #{tpu_custom_call.1} parent=1 // pred_region
      %s58 = ssub.s32 512, 512
      %59 = vsyncadd [#allocation6], %s58
      %s60 = sshll.u32 [#allocation5], 4
      %s61 = int_to_ptr.vmem [resolvable:$true] %s60
      %66 = dma.hbm_to_vmem [thread:$0]  %s8, 512, %s61, [#allocation6], 128, 128, 8
    $region37: #{tpu_custom_call.1} parent=1 // pred_fallthru
      _
    // Predicated region
    $region38: #{tpu_custom_call.1} parent=1 // pred_check
      _
    $region39: #{tpu_custom_call.1} parent=1 // pred_check_branch
      %68 = sbr.rel (0) target = $region41
    $region40: #{tpu_custom_call.1} parent=1 // pred_region
      _
    $region41: #{tpu_custom_call.1} parent=1 // pred_fallthru
      _
    // Predicated region
    $region42: #{tpu_custom_call.1} parent=1 // pred_check
      _
    $region43: #{tpu_custom_call.1} parent=1 // pred_check_branch
      %70 = sbr.rel (0) target = $region45
    $region44: #{tpu_custom_call.1} parent=1 // pred_region
      _
    $region45: #{tpu_custom_call.1} parent=1 // pred_fallthru
      _
    // Predicated region
    $region46: #{tpu_custom_call.1} parent=1 // pred_check
      _
    $region47: #{tpu_custom_call.1} parent=1 // pred_check_branch
      %72 = sbr.rel (0) target = $region49
    $region48: #{tpu_custom_call.1} parent=1 // pred_region
      _
    $region49: #{tpu_custom_call.1} parent=1 // pred_fallthru
      _
    // Predicated region
    $region50: #{tpu_custom_call.1} parent=1 // pred_check
      _
    $region51: #{tpu_custom_call.1} parent=1 // pred_check_branch
      %74 = sbr.rel (0) target = $region53
    $region52: #{tpu_custom_call.1} parent=1 // pred_region
      %s76 = ssub.s32 512, 512
      %77 = vsyncadd [#allocation6], %s76
      %s78 = sshll.u32 [#allocation7], 4
      %s79 = int_to_ptr.vmem [resolvable:$true] %s78
      %84 = dma.hbm_to_vmem [thread:$0]  %s12, 512, %s79, [#allocation6], 128, 128, 8
    $region53: #{tpu_custom_call.1} parent=1 // pred_fallthru
      _
    // Predicated region
    $region54: #{tpu_custom_call.1} parent=1 // pred_check
      _
    $region55: #{tpu_custom_call.1} parent=1 // pred_check_branch
      %86 = sbr.rel (0) target = $region57
    $region56: #{tpu_custom_call.1} parent=1 // pred_region
      _
    $region57: #{tpu_custom_call.1} parent=1 // pred_fallthru
      _
    // Predicated region
    $region58: #{tpu_custom_call.1} parent=1 // pred_check
      _
    $region59: #{tpu_custom_call.1} parent=1 // pred_check_branch
      %88 = sbr.rel (0) target = $region61
    $region60: #{tpu_custom_call.1} parent=1 // pred_region
      _
    $region61: #{tpu_custom_call.1} parent=1 // pred_fallthru
      _
    // Predicated region
    $region62: #{tpu_custom_call.1} parent=1 // pred_check
      _
    $region63: #{tpu_custom_call.1} parent=1 // pred_check_branch
      %90 = sbr.rel (0) target = $region65
    $region64: #{tpu_custom_call.1} parent=1 // pred_region
      _
    $region65: #{tpu_custom_call.1} parent=1 // pred_fallthru
      _
    // Predicated region
    $region66: #{tpu_custom_call.1} parent=1 // pred_check
      _
    $region67: #{tpu_custom_call.1} parent=1 // pred_check_branch
      %92 = sbr.rel (0) target = $region69
    $region68: #{tpu_custom_call.1} parent=1 // pred_region
      _
    $region69: #{tpu_custom_call.1} parent=1 // pred_fallthru
      _
    // Predicated region
    $region70: #{tpu_custom_call.1} parent=1 // pred_check
      _
    $region71: #{tpu_custom_call.1} parent=1 // pred_check_branch
      %94 = sbr.rel (0) target = $region73
    $region72: #{tpu_custom_call.1} parent=1 // pred_region
      _
    $region73: #{tpu_custom_call.1} parent=1 // pred_fallthru
      _
    // Predicated region
    $region74: #{tpu_custom_call.1} parent=1 // pred_check
      _
    $region75: #{tpu_custom_call.1} parent=1 // pred_check_branch
      %96 = sbr.rel (0) target = $region77
    $region76: #{tpu_custom_call.1} parent=1 // pred_region
      %97 = dma.done [#allocation3], 256
    $region77: #{tpu_custom_call.1} parent=1 // pred_fallthru
      _
    // Predicated region
    $region78: #{tpu_custom_call.1} parent=1 // pred_check
      _
    $region79: #{tpu_custom_call.1} parent=1 // pred_check_branch
      %99 = sbr.rel (0) target = $region81
    $region80: #{tpu_custom_call.1} parent=1 // pred_region
      %100 = dma.done [#allocation6], 512
    $region81: #{tpu_custom_call.1} parent=1 // pred_fallthru
      _
    // Predicated region
    $region82: #{tpu_custom_call.1} parent=1 // pred_check
      _
    $region83: #{tpu_custom_call.1} parent=1 // pred_check_branch
      %102 = sbr.rel (0) target = $region85
    $region84: #{tpu_custom_call.1} parent=1 // pred_region
      %103 = dma.done [#allocation6], 512
    $region85: #{tpu_custom_call.1} parent=1 // pred_fallthru
      _
    %v104 = vld [vmem:[#allocation2] sm:$0xff]
    %v105 = vld [vmem:[#allocation2 + $0x8] sm:$0xff]
    %v106 = vld [vmem:[%s2] sm:$0xff]
    %v107 = vld [vmem:[%s2 + $0x8] sm:$0xff]
    %v108 = vld [vmem:[%s2 + $0x10] sm:$0xff]
    %v109 = vld [vmem:[%s2 + $0x18] sm:$0xff]
    %v110 = vld [vmem:[%s3] sm:$0x1]
    %v112 = vlaneseq
    %v113 = vshrl.u32 %v112, 7
    %v114 = vsub.s32 0, %v113
    %v115 = vrot.slane %v110, %v114
    %vm117 = vcmask 261120
    %v119 = vsel %vm117, %v104, 0
    %v122 = vsel %vm117, %v105, 0
    %124 = vmatprep.subr.mxu0 0.0
    %125 = vmatpush1.msra.mxu0 %v106
    %126 = vmatprep.subr.mxu0 0.0
    %127 = vmatpush1.msra.mxu0 %v107
    %128 = vmatprep.subr.mxu0 0.0
    %129 = vmatpush1.msra.mxu0 %v108
    %130 = vmatprep.subr.mxu0 0.0
    %131 = vmatpush1.msra.mxu0 %v109
    %132 = vmatprep.subr.mxu0 0.0
    %133 = vmatpush1.msra.mxu0 0.0
    %134 = vmatprep.subr.mxu0 0.0
    %135 = vmatpush1.msra.mxu0 0.0
    %136 = vmatprep.subr.mxu0 0.0
    %137 = vmatpush1.msra.mxu0 0.0
    %138 = vmatprep.subr.mxu0 0.0
    %139 = vmatpush1.msra.mxu0 0.0
    %140 = vmatprep.subr.mxu0 0.0
    %141 = vmatpush1.msra.mxu0 0.0
    %142 = vmatprep.subr.mxu0 0.0
    %143 = vmatpush1.msra.mxu0 0.0
    %144 = vmatprep.subr.mxu0 0.0
    %145 = vmatpush1.msra.mxu0 0.0
    %146 = vmatprep.subr.mxu0 0.0
    %147 = vmatpush1.msra.mxu0 0.0
    %148 = vmatprep.subr.mxu0 0.0
    %149 = vmatpush1.msra.mxu0 0.0
    %150 = vmatprep.subr.mxu0 0.0
    %151 = vmatpush1.msra.mxu0 0.0
    %152 = vmatprep.subr.mxu0 0.0
    %153 = vmatpush1.msra.mxu0 0.0
    %154 = vmatprep.subr.mxu0 0.0
    %155 = vmatpush1.msra.mxu0 0.0
    %156 = vmatprep.subr.mxu0 0.0
    %157 = vmatpush1.msra.mxu0 0.0
    %158 = vmatprep.subr.mxu0 0.0
    %159 = vmatpush1.msra.mxu0 0.0
    %160 = vmatprep.subr.mxu0 0.0
    %161 = vmatpush1.msra.mxu0 0.0
    %162 = vmatprep.subr.mxu0 0.0
    %163 = vmatpush1.msra.mxu0 0.0
    %164 = vmatprep.subr.mxu0 0.0
    %165 = vmatpush1.msra.mxu0 0.0
    %166 = vmatprep.subr.mxu0 0.0
    %167 = vmatpush1.msra.mxu0 0.0
    %168 = vmatprep.subr.mxu0 0.0
    %169 = vmatpush1.msra.mxu0 0.0
    %170 = vmatprep.subr.mxu0 0.0
    %171 = vmatpush1.msra.mxu0 0.0
    %172 = vmatprep.subr.mxu0 0.0
    %173 = vmatpush1.msra.mxu0 0.0
    %174 = vmatprep.subr.mxu0 0.0
    %175 = vmatpush1.msra.mxu0 0.0
    %176 = vmatprep.subr.mxu0 0.0
    %177 = vmatpush1.msra.mxu0 0.0
    %178 = vmatprep.subr.mxu0 0.0
    %179 = vmatpush1.msra.mxu0 0.0
    %180 = vmatprep.subr.mxu0 0.0
    %181 = vmatpush1.msra.mxu0 0.0
    %182 = vmatprep.subr.mxu0 0.0
    %183 = vmatpush1.msra.mxu0 0.0
    %184 = vmatprep.subr.mxu0 0.0
    %185 = vmatpush1.msra.mxu0 0.0
    %186 = vmatprep.subr.mxu0 0.0
    %187 = vmatpush1.msra.mxu0 0.0
    %188 = vmatprep.mubr.f32.mxu0 0.0
    %189 = vmatmul.mubr.f32.gmra.mrb[0].mxu0 %v119
    %v190 = vpop.f32.mrb[0].mxu0
    %v191 = vadd.f32 %v115, %v190
    %v192 = vpop.f32.mrb[0].mxu0
    %193 = vmatprep.mubr.f32.mxu0 0.0
    %194 = vmatmul.mubr.f32.gmra.mrb[0].mxu0 %v122
    %v195 = vpop.f32.mrb[0].mxu0
    %v196 = vadd.f32 %v115, %v195
    %v197 = vpop.f32.mrb[0].mxu0
    %198 = vdwg.mxu0
    %v199 = vmul.f32 %v191, 0.35355338
    %v200 = vmul.f32 %v196, 0.35355338
    %v201 = vld [vmem:[%s4] sm:$0xff]
    %v202 = vld [vmem:[%s4 + $0x8] sm:$0xff]
    %v203 = vld [vmem:[%s4 + $0x10] sm:$0xff]
    %v204 = vld [vmem:[%s4 + $0x18] sm:$0xff]
    %v205 = vld [vmem:[%s5] sm:$0x1]
    %v207 = vlaneseq
    %v208 = vshrl.u32 %v207, 7
    %v209 = vsub.s32 0, %v208
    %v210 = vrot.slane %v205, %v209
    %212 = vmatprep.subr.mxu0 0.0
    %213 = vmatpush1.msra.mxu0 %v201
    %214 = vmatprep.subr.mxu0 0.0
    %215 = vmatpush1.msra.mxu0 %v202
    %216 = vmatprep.subr.mxu0 0.0
    %217 = vmatpush1.msra.mxu0 %v203
    %218 = vmatprep.subr.mxu0 0.0
    %219 = vmatpush1.msra.mxu0 %v204
    %220 = vmatprep.subr.mxu0 0.0
    %221 = vmatpush1.msra.mxu0 0.0
    %222 = vmatprep.subr.mxu0 0.0
    %223 = vmatpush1.msra.mxu0 0.0
    %224 = vmatprep.subr.mxu0 0.0
    %225 = vmatpush1.msra.mxu0 0.0
    %226 = vmatprep.subr.mxu0 0.0
    %227 = vmatpush1.msra.mxu0 0.0
    %228 = vmatprep.subr.mxu0 0.0
    %229 = vmatpush1.msra.mxu0 0.0
    %230 = vmatprep.subr.mxu0 0.0
    %231 = vmatpush1.msra.mxu0 0.0
    %232 = vmatprep.subr.mxu0 0.0
    %233 = vmatpush1.msra.mxu0 0.0
    %234 = vmatprep.subr.mxu0 0.0
    %235 = vmatpush1.msra.mxu0 0.0
    %236 = vmatprep.subr.mxu0 0.0
    %237 = vmatpush1.msra.mxu0 0.0
    %238 = vmatprep.subr.mxu0 0.0
    %239 = vmatpush1.msra.mxu0 0.0
    %240 = vmatprep.subr.mxu0 0.0
    %241 = vmatpush1.msra.mxu0 0.0
    %242 = vmatprep.subr.mxu0 0.0
    %243 = vmatpush1.msra.mxu0 0.0
    %244 = vmatprep.subr.mxu0 0.0
    %245 = vmatpush1.msra.mxu0 0.0
    %246 = vmatprep.subr.mxu0 0.0
    %247 = vmatpush1.msra.mxu0 0.0
    %248 = vmatprep.subr.mxu0 0.0
    %249 = vmatpush1.msra.mxu0 0.0
    %250 = vmatprep.subr.mxu0 0.0
    %251 = vmatpush1.msra.mxu0 0.0
    %252 = vmatprep.subr.mxu0 0.0
    %253 = vmatpush1.msra.mxu0 0.0
    %254 = vmatprep.subr.mxu0 0.0
    %255 = vmatpush1.msra.mxu0 0.0
    %256 = vmatprep.subr.mxu0 0.0
    %257 = vmatpush1.msra.mxu0 0.0
    %258 = vmatprep.subr.mxu0 0.0
    %259 = vmatpush1.msra.mxu0 0.0
    %260 = vmatprep.subr.mxu0 0.0
    %261 = vmatpush1.msra.mxu0 0.0
    %262 = vmatprep.subr.mxu0 0.0
    %263 = vmatpush1.msra.mxu0 0.0
    %264 = vmatprep.subr.mxu0 0.0
    %265 = vmatpush1.msra.mxu0 0.0
    %266 = vmatprep.subr.mxu0 0.0
    %267 = vmatpush1.msra.mxu0 0.0
    %268 = vmatprep.subr.mxu0 0.0
    %269 = vmatpush1.msra.mxu0 0.0
    %270 = vmatprep.subr.mxu0 0.0
    %271 = vmatpush1.msra.mxu0 0.0
    %272 = vmatprep.subr.mxu0 0.0
    %273 = vmatpush1.msra.mxu0 0.0
    %274 = vmatprep.subr.mxu0 0.0
    %275 = vmatpush1.msra.mxu0 0.0
    %276 = vmatprep.mubr.f32.mxu0 0.0
    %277 = vmatmul.mubr.f32.gmra.mrb[0].mxu0 %v119
    %v278 = vpop.f32.mrb[0].mxu0
    %v279 = vadd.f32 %v210, %v278
    %v280 = vpop.f32.mrb[0].mxu0
    %281 = vmatprep.mubr.f32.mxu0 0.0
    %282 = vmatmul.mubr.f32.gmra.mrb[0].mxu0 %v122
    %v283 = vpop.f32.mrb[0].mxu0
    %v284 = vadd.f32 %v210, %v283
    %v285 = vpop.f32.mrb[0].mxu0
    %286 = vdwg.mxu0
    %v287 = vld [vmem:[%s6] sm:$0xff]
    %v288 = vld [vmem:[%s6 + $0x8] sm:$0xff]
    %v289 = vld [vmem:[%s6 + $0x10] sm:$0xff]
    %v290 = vld [vmem:[%s6 + $0x18] sm:$0xff]
    %v291 = vld [vmem:[%s7] sm:$0x1]
    %v293 = vlaneseq
    %v294 = vshrl.u32 %v293, 7
    %v295 = vsub.s32 0, %v294
    %v296 = vrot.slane %v291, %v295
    %298 = vmatprep.subr.mxu0 0.0
    %299 = vmatpush1.msra.mxu0 %v287
    %300 = vmatprep.subr.mxu0 0.0
    %301 = vmatpush1.msra.mxu0 %v288
    %302 = vmatprep.subr.mxu0 0.0
    %303 = vmatpush1.msra.mxu0 %v289
    %304 = vmatprep.subr.mxu0 0.0
    %305 = vmatpush1.msra.mxu0 %v290
    %306 = vmatprep.subr.mxu0 0.0
    %307 = vmatpush1.msra.mxu0 0.0
    %308 = vmatprep.subr.mxu0 0.0
    %309 = vmatpush1.msra.mxu0 0.0
    %310 = vmatprep.subr.mxu0 0.0
    %311 = vmatpush1.msra.mxu0 0.0
    %312 = vmatprep.subr.mxu0 0.0
    %313 = vmatpush1.msra.mxu0 0.0
    %314 = vmatprep.subr.mxu0 0.0
    %315 = vmatpush1.msra.mxu0 0.0
    %316 = vmatprep.subr.mxu0 0.0
    %317 = vmatpush1.msra.mxu0 0.0
    %318 = vmatprep.subr.mxu0 0.0
    %319 = vmatpush1.msra.mxu0 0.0
    %320 = vmatprep.subr.mxu0 0.0
    %321 = vmatpush1.msra.mxu0 0.0
    %322 = vmatprep.subr.mxu0 0.0
    %323 = vmatpush1.msra.mxu0 0.0
    %324 = vmatprep.subr.mxu0 0.0
    %325 = vmatpush1.msra.mxu0 0.0
    %326 = vmatprep.subr.mxu0 0.0
    %327 = vmatpush1.msra.mxu0 0.0
    %328 = vmatprep.subr.mxu0 0.0
    %329 = vmatpush1.msra.mxu0 0.0
    %330 = vmatprep.subr.mxu0 0.0
    %331 = vmatpush1.msra.mxu0 0.0
    %332 = vmatprep.subr.mxu0 0.0
    %333 = vmatpush1.msra.mxu0 0.0
    %334 = vmatprep.subr.mxu0 0.0
    %335 = vmatpush1.msra.mxu0 0.0
    %336 = vmatprep.subr.mxu0 0.0
    %337 = vmatpush1.msra.mxu0 0.0
    %338 = vmatprep.subr.mxu0 0.0
    %339 = vmatpush1.msra.mxu0 0.0
    %340 = vmatprep.subr.mxu0 0.0
    %341 = vmatpush1.msra.mxu0 0.0
    %342 = vmatprep.subr.mxu0 0.0
    %343 = vmatpush1.msra.mxu0 0.0
    %344 = vmatprep.subr.mxu0 0.0
    %345 = vmatpush1.msra.mxu0 0.0
    %346 = vmatprep.subr.mxu0 0.0
    %347 = vmatpush1.msra.mxu0 0.0
    %348 = vmatprep.subr.mxu0 0.0
    %349 = vmatpush1.msra.mxu0 0.0
    %350 = vmatprep.subr.mxu0 0.0
    %351 = vmatpush1.msra.mxu0 0.0
    %352 = vmatprep.subr.mxu0 0.0
    %353 = vmatpush1.msra.mxu0 0.0
    %354 = vmatprep.subr.mxu0 0.0
    %355 = vmatpush1.msra.mxu0 0.0
    %356 = vmatprep.subr.mxu0 0.0
    %357 = vmatpush1.msra.mxu0 0.0
    %358 = vmatprep.subr.mxu0 0.0
    %359 = vmatpush1.msra.mxu0 0.0
    %360 = vmatprep.subr.mxu0 0.0
    %361 = vmatpush1.msra.mxu0 0.0
    %362 = vmatprep.mubr.f32.mxu0 0.0
    %363 = vmatmul.mubr.f32.gmra.mrb[0].mxu0 %v119
    %v364 = vpop.f32.mrb[0].mxu0
    %v365 = vadd.f32 %v296, %v364
    %v366 = vpop.f32.mrb[0].mxu0
    %367 = vmatprep.mubr.f32.mxu0 0.0
    %368 = vmatmul.mubr.f32.gmra.mrb[0].mxu0 %v122
    %v369 = vpop.f32.mrb[0].mxu0
    %v370 = vadd.f32 %v296, %v369
    %v371 = vpop.f32.mrb[0].mxu0
    %372 = vdwg.mxu0
    %v373 = vld [vmem:[%s1] sm:$0x1]
    %v374 = vld [vmem:[%s1 + $0x1] sm:$0x1]
    %v375 = vmul.f32 %v373, -1e+09
    %v376 = vmul.f32 %v374, -1e+09
    %v379 = vlaneseq
    %v380 = vshrl.u32 %v379, 7
    %v381 = vsub.s32 0, %v380
    %v382 = vrot.slane %v375, %v381
    %v383 = vlaneseq
    %v384 = vshrl.u32 %v383, 7
    %v385 = vsub.s32 0, %v384
    %v386 = vrot.slane %v376, %v385
    %vm389 = vcmask 64512
    %v391 = vsel %vm389, %v199, 0
    %v394 = vsel %vm389, %v279, 0
    %396 = vmatprep.subr.mxu0 0.0
    %397 = vmatpush1.xpose.msra.mxu0 %v394
    %398 = vmatprep.subr.mxu0 0.0
    %399 = vmatpush1.xpose.msra.mxu0 0.0
    %400 = vmatprep.subr.mxu0 0.0
    %401 = vmatpush1.xpose.msra.mxu0 0.0
    %402 = vmatprep.subr.mxu0 0.0
    %403 = vmatpush1.xpose.msra.mxu0 0.0
    %404 = vmatprep.subr.mxu0 0.0
    %405 = vmatpush1.xpose.msra.mxu0 0.0
    %406 = vmatprep.subr.mxu0 0.0
    %407 = vmatpush1.xpose.msra.mxu0 0.0
    %408 = vmatprep.subr.mxu0 0.0
    %409 = vmatpush1.xpose.msra.mxu0 0.0
    %410 = vmatprep.subr.mxu0 0.0
    %411 = vmatpush1.xpose.msra.mxu0 0.0
    %412 = vmatprep.subr.mxu0 0.0
    %413 = vmatpush1.xpose.msra.mxu0 0.0
    %414 = vmatprep.subr.mxu0 0.0
    %415 = vmatpush1.xpose.msra.mxu0 0.0
    %416 = vmatprep.subr.mxu0 0.0
    %417 = vmatpush1.xpose.msra.mxu0 0.0
    %418 = vmatprep.subr.mxu0 0.0
    %419 = vmatpush1.xpose.msra.mxu0 0.0
    %420 = vmatprep.subr.mxu0 0.0
    %421 = vmatpush1.xpose.msra.mxu0 0.0
    %422 = vmatprep.subr.mxu0 0.0
    %423 = vmatpush1.xpose.msra.mxu0 0.0
    %424 = vmatprep.subr.mxu0 0.0
    %425 = vmatpush1.xpose.msra.mxu0 0.0
    %426 = vmatprep.subr.mxu0 0.0
    %427 = vmatpush1.xpose.msra.mxu0 0.0
    %428 = vmatprep.subr.mxu0 0.0
    %429 = vmatpush1.xpose.msra.mxu0 0.0
    %430 = vmatprep.subr.mxu0 0.0
    %431 = vmatpush1.xpose.msra.mxu0 0.0
    %432 = vmatprep.subr.mxu0 0.0
    %433 = vmatpush1.xpose.msra.mxu0 0.0
    %434 = vmatprep.subr.mxu0 0.0
    %435 = vmatpush1.xpose.msra.mxu0 0.0
    %436 = vmatprep.subr.mxu0 0.0
    %437 = vmatpush1.xpose.msra.mxu0 0.0
    %438 = vmatprep.subr.mxu0 0.0
    %439 = vmatpush1.xpose.msra.mxu0 0.0
    %440 = vmatprep.subr.mxu0 0.0
    %441 = vmatpush1.xpose.msra.mxu0 0.0
    %442 = vmatprep.subr.mxu0 0.0
    %443 = vmatpush1.xpose.msra.mxu0 0.0
    %444 = vmatprep.subr.mxu0 0.0
    %445 = vmatpush1.xpose.msra.mxu0 0.0
    %446 = vmatprep.subr.mxu0 0.0
    %447 = vmatpush1.xpose.msra.mxu0 0.0
    %448 = vmatprep.subr.mxu0 0.0
    %449 = vmatpush1.xpose.msra.mxu0 0.0
    %450 = vmatprep.subr.mxu0 0.0
    %451 = vmatpush1.xpose.msra.mxu0 0.0
    %452 = vmatprep.subr.mxu0 0.0
    %453 = vmatpush1.xpose.msra.mxu0 0.0
    %454 = vmatprep.subr.mxu0 0.0
    %455 = vmatpush1.xpose.msra.mxu0 0.0
    %456 = vmatprep.subr.mxu0 0.0
    %457 = vmatpush1.xpose.msra.mxu0 0.0
    %458 = vmatprep.subr.mxu0 0.0
    %459 = vmatpush1.xpose.msra.mxu0 0.0
    %460 = vmatprep.mubr.f32.mxu0 0.0
    %461 = vmatmul.mubr.f32.gmra.mrb[0].mxu0 %v391
    %v462 = vpop.f32.mrb[0].mxu0
    %v463 = vadd.f32 %v382, %v462
    %v464 = vpop.f32.mrb[0].mxu0
    %465 = vdwg.mxu0
    %v467 = vsel %vm389, %v200, 0
    %v470 = vsel %vm389, %v284, 0
    %472 = vmatprep.subr.mxu0 0.0
    %473 = vmatpush1.xpose.msra.mxu0 %v470
    %474 = vmatprep.subr.mxu0 0.0
    %475 = vmatpush1.xpose.msra.mxu0 0.0
    %476 = vmatprep.subr.mxu0 0.0
    %477 = vmatpush1.xpose.msra.mxu0 0.0
    %478 = vmatprep.subr.mxu0 0.0
    %479 = vmatpush1.xpose.msra.mxu0 0.0
    %480 = vmatprep.subr.mxu0 0.0
    %481 = vmatpush1.xpose.msra.mxu0 0.0
    %482 = vmatprep.subr.mxu0 0.0
    %483 = vmatpush1.xpose.msra.mxu0 0.0
    %484 = vmatprep.subr.mxu0 0.0
    %485 = vmatpush1.xpose.msra.mxu0 0.0
    %486 = vmatprep.subr.mxu0 0.0
    %487 = vmatpush1.xpose.msra.mxu0 0.0
    %488 = vmatprep.subr.mxu0 0.0
    %489 = vmatpush1.xpose.msra.mxu0 0.0
    %490 = vmatprep.subr.mxu0 0.0
    %491 = vmatpush1.xpose.msra.mxu0 0.0
    %492 = vmatprep.subr.mxu0 0.0
    %493 = vmatpush1.xpose.msra.mxu0 0.0
    %494 = vmatprep.subr.mxu0 0.0
    %495 = vmatpush1.xpose.msra.mxu0 0.0
    %496 = vmatprep.subr.mxu0 0.0
    %497 = vmatpush1.xpose.msra.mxu0 0.0
    %498 = vmatprep.subr.mxu0 0.0
    %499 = vmatpush1.xpose.msra.mxu0 0.0
    %500 = vmatprep.subr.mxu0 0.0
    %501 = vmatpush1.xpose.msra.mxu0 0.0
    %502 = vmatprep.subr.mxu0 0.0
    %503 = vmatpush1.xpose.msra.mxu0 0.0
    %504 = vmatprep.subr.mxu0 0.0
    %505 = vmatpush1.xpose.msra.mxu0 0.0
    %506 = vmatprep.subr.mxu0 0.0
    %507 = vmatpush1.xpose.msra.mxu0 0.0
    %508 = vmatprep.subr.mxu0 0.0
    %509 = vmatpush1.xpose.msra.mxu0 0.0
    %510 = vmatprep.subr.mxu0 0.0
    %511 = vmatpush1.xpose.msra.mxu0 0.0
    %512 = vmatprep.subr.mxu0 0.0
    %513 = vmatpush1.xpose.msra.mxu0 0.0
    %514 = vmatprep.subr.mxu0 0.0
    %515 = vmatpush1.xpose.msra.mxu0 0.0
    %516 = vmatprep.subr.mxu0 0.0
    %517 = vmatpush1.xpose.msra.mxu0 0.0
    %518 = vmatprep.subr.mxu0 0.0
    %519 = vmatpush1.xpose.msra.mxu0 0.0
    %520 = vmatprep.subr.mxu0 0.0
    %521 = vmatpush1.xpose.msra.mxu0 0.0
    %522 = vmatprep.subr.mxu0 0.0
    %523 = vmatpush1.xpose.msra.mxu0 0.0
    %524 = vmatprep.subr.mxu0 0.0
    %525 = vmatpush1.xpose.msra.mxu0 0.0
    %526 = vmatprep.subr.mxu0 0.0
    %527 = vmatpush1.xpose.msra.mxu0 0.0
    %528 = vmatprep.subr.mxu0 0.0
    %529 = vmatpush1.xpose.msra.mxu0 0.0
    %530 = vmatprep.subr.mxu0 0.0
    %531 = vmatpush1.xpose.msra.mxu0 0.0
    %532 = vmatprep.subr.mxu0 0.0
    %533 = vmatpush1.xpose.msra.mxu0 0.0
    %534 = vmatprep.subr.mxu0 0.0
    %535 = vmatpush1.xpose.msra.mxu0 0.0
    %536 = vmatprep.mubr.f32.mxu0 0.0
    %537 = vmatmul.mubr.f32.gmra.mrb[0].mxu0 %v467
    %v538 = vpop.f32.mrb[0].mxu0
    %v539 = vadd.f32 %v386, %v538
    %v540 = vpop.f32.mrb[0].mxu0
    %541 = vdwg.mxu0
    %v542 = vsel %vm389, %v463, -inf
    %543 = vmax.xlane.f32.xlu0 %v542
    %v544 = vpop.xlane.xlu0 %543
    %v545 = vsel %vm389, %v539, -inf
    %546 = vmax.xlane.f32.xlu0 %v545
    %v547 = vpop.xlane.xlu0 %546
    %v548 = vsub.f32 %v463, %v544
    %v549 = vsub.f32 %v539, %v547
    %v550 = vmul.f32 %v548, 1.442695
    %v551 = vpow.pop %v550
    %v552 = vmul.f32 %v549, 1.442695
    %v553 = vpow.pop %v552
    %v554 = vsel %vm389, %v551, 0.0
    %555 = vadd.xlane.f32.xlu0 %v554
    %v556 = vpop.xlane.xlu0 %555
    %v557 = vsel %vm389, %v553, 0.0
    %558 = vadd.xlane.f32.xlu0 %v557
    %v559 = vpop.xlane.xlu0 %558
    %v560 = vrcp.pop %v556
    %v561 = vmul.f32 %v551, %v560
    %v562 = vrcp.pop %v559
    %v563 = vmul.f32 %v553, %v562
    %564 = vst.msk [vmem:[#allocation9] sm:$0xff] %vm389, %v561
    %565 = vst.msk [vmem:[#allocation9 + $0x8] sm:$0xff] %vm389, %v563
    %v567 = vsel %vm389, %v561, 0
    %569 = vmatprep.subr.mxu0 0.0
    %570 = vmatpush1.msra.mxu0 %v365
    %571 = vmatprep.subr.mxu0 0.0
    %572 = vmatpush1.msra.mxu0 0.0
    %573 = vmatprep.subr.mxu0 0.0
    %574 = vmatpush1.msra.mxu0 0.0
    %575 = vmatprep.subr.mxu0 0.0
    %576 = vmatpush1.msra.mxu0 0.0
    %577 = vmatprep.subr.mxu0 0.0
    %578 = vmatpush1.msra.mxu0 0.0
    %579 = vmatprep.subr.mxu0 0.0
    %580 = vmatpush1.msra.mxu0 0.0
    %581 = vmatprep.subr.mxu0 0.0
    %582 = vmatpush1.msra.mxu0 0.0
    %583 = vmatprep.subr.mxu0 0.0
    %584 = vmatpush1.msra.mxu0 0.0
    %585 = vmatprep.subr.mxu0 0.0
    %586 = vmatpush1.msra.mxu0 0.0
    %587 = vmatprep.subr.mxu0 0.0
    %588 = vmatpush1.msra.mxu0 0.0
    %589 = vmatprep.subr.mxu0 0.0
    %590 = vmatpush1.msra.mxu0 0.0
    %591 = vmatprep.subr.mxu0 0.0
    %592 = vmatpush1.msra.mxu0 0.0
    %593 = vmatprep.subr.mxu0 0.0
    %594 = vmatpush1.msra.mxu0 0.0
    %595 = vmatprep.subr.mxu0 0.0
    %596 = vmatpush1.msra.mxu0 0.0
    %597 = vmatprep.subr.mxu0 0.0
    %598 = vmatpush1.msra.mxu0 0.0
    %599 = vmatprep.subr.mxu0 0.0
    %600 = vmatpush1.msra.mxu0 0.0
    %601 = vmatprep.subr.mxu0 0.0
    %602 = vmatpush1.msra.mxu0 0.0
    %603 = vmatprep.subr.mxu0 0.0
    %604 = vmatpush1.msra.mxu0 0.0
    %605 = vmatprep.subr.mxu0 0.0
    %606 = vmatpush1.msra.mxu0 0.0
    %607 = vmatprep.subr.mxu0 0.0
    %608 = vmatpush1.msra.mxu0 0.0
    %609 = vmatprep.subr.mxu0 0.0
    %610 = vmatpush1.msra.mxu0 0.0
    %611 = vmatprep.subr.mxu0 0.0
    %612 = vmatpush1.msra.mxu0 0.0
    %613 = vmatprep.subr.mxu0 0.0
    %614 = vmatpush1.msra.mxu0 0.0
    %615 = vmatprep.subr.mxu0 0.0
    %616 = vmatpush1.msra.mxu0 0.0
    %617 = vmatprep.subr.mxu0 0.0
    %618 = vmatpush1.msra.mxu0 0.0
    %619 = vmatprep.subr.mxu0 0.0
    %620 = vmatpush1.msra.mxu0 0.0
    %621 = vmatprep.subr.mxu0 0.0
    %622 = vmatpush1.msra.mxu0 0.0
    %623 = vmatprep.subr.mxu0 0.0
    %624 = vmatpush1.msra.mxu0 0.0
    %625 = vmatprep.subr.mxu0 0.0
    %626 = vmatpush1.msra.mxu0 0.0
    %627 = vmatprep.subr.mxu0 0.0
    %628 = vmatpush1.msra.mxu0 0.0
    %629 = vmatprep.subr.mxu0 0.0
    %630 = vmatpush1.msra.mxu0 0.0
    %631 = vmatprep.subr.mxu0 0.0
    %632 = vmatpush1.msra.mxu0 0.0
    %633 = vmatprep.mubr.f32.mxu0 0.0
    %634 = vmatmul.mubr.f32.gmra.mrb[0].mxu0 %v567
    %v635 = vpop.f32.mrb[0].mxu0
    %v636 = vadd.f32 0.0, %v635
    %v637 = vpop.f32.mrb[0].mxu0
    %638 = vdwg.mxu0
    %v640 = vsel %vm389, %v563, 0
    %642 = vmatprep.subr.mxu0 0.0
    %643 = vmatpush1.msra.mxu0 %v370
    %644 = vmatprep.subr.mxu0 0.0
    %645 = vmatpush1.msra.mxu0 0.0
    %646 = vmatprep.subr.mxu0 0.0
    %647 = vmatpush1.msra.mxu0 0.0
    %648 = vmatprep.subr.mxu0 0.0
    %649 = vmatpush1.msra.mxu0 0.0
    %650 = vmatprep.subr.mxu0 0.0
    %651 = vmatpush1.msra.mxu0 0.0
    %652 = vmatprep.subr.mxu0 0.0
    %653 = vmatpush1.msra.mxu0 0.0
    %654 = vmatprep.subr.mxu0 0.0
    %655 = vmatpush1.msra.mxu0 0.0
    %656 = vmatprep.subr.mxu0 0.0
    %657 = vmatpush1.msra.mxu0 0.0
    %658 = vmatprep.subr.mxu0 0.0
    %659 = vmatpush1.msra.mxu0 0.0
    %660 = vmatprep.subr.mxu0 0.0
    %661 = vmatpush1.msra.mxu0 0.0
    %662 = vmatprep.subr.mxu0 0.0
    %663 = vmatpush1.msra.mxu0 0.0
    %664 = vmatprep.subr.mxu0 0.0
    %665 = vmatpush1.msra.mxu0 0.0
    %666 = vmatprep.subr.mxu0 0.0
    %667 = vmatpush1.msra.mxu0 0.0
    %668 = vmatprep.subr.mxu0 0.0
    %669 = vmatpush1.msra.mxu0 0.0
    %670 = vmatprep.subr.mxu0 0.0
    %671 = vmatpush1.msra.mxu0 0.0
    %672 = vmatprep.subr.mxu0 0.0
    %673 = vmatpush1.msra.mxu0 0.0
    %674 = vmatprep.subr.mxu0 0.0
    %675 = vmatpush1.msra.mxu0 0.0
    %676 = vmatprep.subr.mxu0 0.0
    %677 = vmatpush1.msra.mxu0 0.0
    %678 = vmatprep.subr.mxu0 0.0
    %679 = vmatpush1.msra.mxu0 0.0
    %680 = vmatprep.subr.mxu0 0.0
    %681 = vmatpush1.msra.mxu0 0.0
    %682 = vmatprep.subr.mxu0 0.0
    %683 = vmatpush1.msra.mxu0 0.0
    %684 = vmatprep.subr.mxu0 0.0
    %685 = vmatpush1.msra.mxu0 0.0
    %686 = vmatprep.subr.mxu0 0.0
    %687 = vmatpush1.msra.mxu0 0.0
    %688 = vmatprep.subr.mxu0 0.0
    %689 = vmatpush1.msra.mxu0 0.0
    %690 = vmatprep.subr.mxu0 0.0
    %691 = vmatpush1.msra.mxu0 0.0
    %692 = vmatprep.subr.mxu0 0.0
    %693 = vmatpush1.msra.mxu0 0.0
    %694 = vmatprep.subr.mxu0 0.0
    %695 = vmatpush1.msra.mxu0 0.0
    %696 = vmatprep.subr.mxu0 0.0
    %697 = vmatpush1.msra.mxu0 0.0
    %698 = vmatprep.subr.mxu0 0.0
    %699 = vmatpush1.msra.mxu0 0.0
    %700 = vmatprep.subr.mxu0 0.0
    %701 = vmatpush1.msra.mxu0 0.0
    %702 = vmatprep.subr.mxu0 0.0
    %703 = vmatpush1.msra.mxu0 0.0
    %704 = vmatprep.subr.mxu0 0.0
    %705 = vmatpush1.msra.mxu0 0.0
    %706 = vmatprep.mubr.f32.mxu0 0.0
    %707 = vmatmul.mubr.f32.gmra.mrb[0].mxu0 %v640
    %v708 = vpop.f32.mrb[0].mxu0
    %v709 = vadd.f32 0.0, %v708
    %v710 = vpop.f32.mrb[0].mxu0
    %711 = vdwg.mxu0
    %712 = vrot.lane.b32.xlu0 %v199, 120
    %v713 = vpop.permute.xlu0 %712
    %714 = vrot.lane.b32.xlu0 %v279, 120
    %v715 = vpop.permute.xlu0 %714
    %v716 = vsel %vm389, %v713, 0
    %v718 = vsel %vm389, %v715, 0
    %720 = vmatprep.subr.mxu0 0.0
    %721 = vmatpush1.xpose.msra.mxu0 %v718
    %722 = vmatprep.subr.mxu0 0.0
    %723 = vmatpush1.xpose.msra.mxu0 0.0
    %724 = vmatprep.subr.mxu0 0.0
    %725 = vmatpush1.xpose.msra.mxu0 0.0
    %726 = vmatprep.subr.mxu0 0.0
    %727 = vmatpush1.xpose.msra.mxu0 0.0
    %728 = vmatprep.subr.mxu0 0.0
    %729 = vmatpush1.xpose.msra.mxu0 0.0
    %730 = vmatprep.subr.mxu0 0.0
    %731 = vmatpush1.xpose.msra.mxu0 0.0
    %732 = vmatprep.subr.mxu0 0.0
    %733 = vmatpush1.xpose.msra.mxu0 0.0
    %734 = vmatprep.subr.mxu0 0.0
    %735 = vmatpush1.xpose.msra.mxu0 0.0
    %736 = vmatprep.subr.mxu0 0.0
    %737 = vmatpush1.xpose.msra.mxu0 0.0
    %738 = vmatprep.subr.mxu0 0.0
    %739 = vmatpush1.xpose.msra.mxu0 0.0
    %740 = vmatprep.subr.mxu0 0.0
    %741 = vmatpush1.xpose.msra.mxu0 0.0
    %742 = vmatprep.subr.mxu0 0.0
    %743 = vmatpush1.xpose.msra.mxu0 0.0
    %744 = vmatprep.subr.mxu0 0.0
    %745 = vmatpush1.xpose.msra.mxu0 0.0
    %746 = vmatprep.subr.mxu0 0.0
    %747 = vmatpush1.xpose.msra.mxu0 0.0
    %748 = vmatprep.subr.mxu0 0.0
    %749 = vmatpush1.xpose.msra.mxu0 0.0
    %750 = vmatprep.subr.mxu0 0.0
    %751 = vmatpush1.xpose.msra.mxu0 0.0
    %752 = vmatprep.subr.mxu0 0.0
    %753 = vmatpush1.xpose.msra.mxu0 0.0
    %754 = vmatprep.subr.mxu0 0.0
    %755 = vmatpush1.xpose.msra.mxu0 0.0
    %756 = vmatprep.subr.mxu0 0.0
    %757 = vmatpush1.xpose.msra.mxu0 0.0
    %758 = vmatprep.subr.mxu0 0.0
    %759 = vmatpush1.xpose.msra.mxu0 0.0
    %760 = vmatprep.subr.mxu0 0.0
    %761 = vmatpush1.xpose.msra.mxu0 0.0
    %762 = vmatprep.subr.mxu0 0.0
    %763 = vmatpush1.xpose.msra.mxu0 0.0
    %764 = vmatprep.subr.mxu0 0.0
    %765 = vmatpush1.xpose.msra.mxu0 0.0
    %766 = vmatprep.subr.mxu0 0.0
    %767 = vmatpush1.xpose.msra.mxu0 0.0
    %768 = vmatprep.subr.mxu0 0.0
    %769 = vmatpush1.xpose.msra.mxu0 0.0
    %770 = vmatprep.subr.mxu0 0.0
    %771 = vmatpush1.xpose.msra.mxu0 0.0
    %772 = vmatprep.subr.mxu0 0.0
    %773 = vmatpush1.xpose.msra.mxu0 0.0
    %774 = vmatprep.subr.mxu0 0.0
    %775 = vmatpush1.xpose.msra.mxu0 0.0
    %776 = vmatprep.subr.mxu0 0.0
    %777 = vmatpush1.xpose.msra.mxu0 0.0
    %778 = vmatprep.subr.mxu0 0.0
    %779 = vmatpush1.xpose.msra.mxu0 0.0
    %780 = vmatprep.subr.mxu0 0.0
    %781 = vmatpush1.xpose.msra.mxu0 0.0
    %782 = vmatprep.subr.mxu0 0.0
    %783 = vmatpush1.xpose.msra.mxu0 0.0
    %784 = vmatprep.mubr.f32.mxu0 0.0
    %785 = vmatmul.mubr.f32.gmra.mrb[0].mxu0 %v716
    %v786 = vpop.f32.mrb[0].mxu0
    %v787 = vadd.f32 %v382, %v786
    %v788 = vpop.f32.mrb[0].mxu0
    %789 = vdwg.mxu0
    %790 = vrot.lane.b32.xlu0 %v200, 120
    %v791 = vpop.permute.xlu0 %790
    %792 = vrot.lane.b32.xlu0 %v284, 120
    %v793 = vpop.permute.xlu0 %792
    %v794 = vsel %vm389, %v791, 0
    %v796 = vsel %vm389, %v793, 0
    %798 = vmatprep.subr.mxu0 0.0
    %799 = vmatpush1.xpose.msra.mxu0 %v796
    %800 = vmatprep.subr.mxu0 0.0
    %801 = vmatpush1.xpose.msra.mxu0 0.0
    %802 = vmatprep.subr.mxu0 0.0
    %803 = vmatpush1.xpose.msra.mxu0 0.0
    %804 = vmatprep.subr.mxu0 0.0
    %805 = vmatpush1.xpose.msra.mxu0 0.0
    %806 = vmatprep.subr.mxu0 0.0
    %807 = vmatpush1.xpose.msra.mxu0 0.0
    %808 = vmatprep.subr.mxu0 0.0
    %809 = vmatpush1.xpose.msra.mxu0 0.0
    %810 = vmatprep.subr.mxu0 0.0
    %811 = vmatpush1.xpose.msra.mxu0 0.0
    %812 = vmatprep.subr.mxu0 0.0
    %813 = vmatpush1.xpose.msra.mxu0 0.0
    %814 = vmatprep.subr.mxu0 0.0
    %815 = vmatpush1.xpose.msra.mxu0 0.0
    %816 = vmatprep.subr.mxu0 0.0
    %817 = vmatpush1.xpose.msra.mxu0 0.0
    %818 = vmatprep.subr.mxu0 0.0
    %819 = vmatpush1.xpose.msra.mxu0 0.0
    %820 = vmatprep.subr.mxu0 0.0
    %821 = vmatpush1.xpose.msra.mxu0 0.0
    %822 = vmatprep.subr.mxu0 0.0
    %823 = vmatpush1.xpose.msra.mxu0 0.0
    %824 = vmatprep.subr.mxu0 0.0
    %825 = vmatpush1.xpose.msra.mxu0 0.0
    %826 = vmatprep.subr.mxu0 0.0
    %827 = vmatpush1.xpose.msra.mxu0 0.0
    %828 = vmatprep.subr.mxu0 0.0
    %829 = vmatpush1.xpose.msra.mxu0 0.0
    %830 = vmatprep.subr.mxu0 0.0
    %831 = vmatpush1.xpose.msra.mxu0 0.0
    %832 = vmatprep.subr.mxu0 0.0
    %833 = vmatpush1.xpose.msra.mxu0 0.0
    %834 = vmatprep.subr.mxu0 0.0
    %835 = vmatpush1.xpose.msra.mxu0 0.0
    %836 = vmatprep.subr.mxu0 0.0
    %837 = vmatpush1.xpose.msra.mxu0 0.0
    %838 = vmatprep.subr.mxu0 0.0
    %839 = vmatpush1.xpose.msra.mxu0 0.0
    %840 = vmatprep.subr.mxu0 0.0
    %841 = vmatpush1.xpose.msra.mxu0 0.0
    %842 = vmatprep.subr.mxu0 0.0
    %843 = vmatpush1.xpose.msra.mxu0 0.0
    %844 = vmatprep.subr.mxu0 0.0
    %845 = vmatpush1.xpose.msra.mxu0 0.0
    %846 = vmatprep.subr.mxu0 0.0
    %847 = vmatpush1.xpose.msra.mxu0 0.0
    %848 = vmatprep.subr.mxu0 0.0
    %849 = vmatpush1.xpose.msra.mxu0 0.0
    %850 = vmatprep.subr.mxu0 0.0
    %851 = vmatpush1.xpose.msra.mxu0 0.0
    %852 = vmatprep.subr.mxu0 0.0
    %853 = vmatpush1.xpose.msra.mxu0 0.0
    %854 = vmatprep.subr.mxu0 0.0
    %855 = vmatpush1.xpose.msra.mxu0 0.0
    %856 = vmatprep.subr.mxu0 0.0
    %857 = vmatpush1.xpose.msra.mxu0 0.0
    %858 = vmatprep.subr.mxu0 0.0
    %859 = vmatpush1.xpose.msra.mxu0 0.0
    %860 = vmatprep.subr.mxu0 0.0
    %861 = vmatpush1.xpose.msra.mxu0 0.0
    %862 = vmatprep.mubr.f32.mxu0 0.0
    %863 = vmatmul.mubr.f32.gmra.mrb[0].mxu0 %v794
    %v864 = vpop.f32.mrb[0].mxu0
    %v865 = vadd.f32 %v386, %v864
    %v866 = vpop.f32.mrb[0].mxu0
    %867 = vdwg.mxu0
    %v868 = vsel %vm389, %v787, -inf
    %869 = vmax.xlane.f32.xlu0 %v868
    %v870 = vpop.xlane.xlu0 %869
    %v871 = vsel %vm389, %v865, -inf
    %872 = vmax.xlane.f32.xlu0 %v871
    %v873 = vpop.xlane.xlu0 %872
    %v874 = vsub.f32 %v787, %v870
    %v875 = vsub.f32 %v865, %v873
    %v876 = vmul.f32 %v874, 1.442695
    %v877 = vpow.pop %v876
    %v878 = vmul.f32 %v875, 1.442695
    %v879 = vpow.pop %v878
    %v880 = vsel %vm389, %v877, 0.0
    %881 = vadd.xlane.f32.xlu0 %v880
    %v882 = vpop.xlane.xlu0 %881
    %v883 = vsel %vm389, %v879, 0.0
    %884 = vadd.xlane.f32.xlu0 %v883
    %v885 = vpop.xlane.xlu0 %884
    %v886 = vrcp.pop %v882
    %v887 = vmul.f32 %v877, %v886
    %v888 = vrcp.pop %v885
    %v889 = vmul.f32 %v879, %v888
    %892 = vrot.lane.b32.xlu0 %v887, 8
    %v893 = vpop.permute.xlu0 %892
    %894 = vrot.lane.b32.xlu0 %v889, 8
    %v895 = vpop.permute.xlu0 %894
    %vm898 = vcmask 130112
    %899 = vst.msk [vmem:[#allocation9] sm:$0xff] %vm898, %v893
    %900 = vst.msk [vmem:[#allocation9 + $0x8] sm:$0xff] %vm898, %v895
    %902 = vrot.lane.b32.xlu0 %v365, 120
    %v903 = vpop.permute.xlu0 %902
    %v905 = vsel %vm389, %v887, 0
    %907 = vmatprep.subr.mxu0 0.0
    %908 = vmatpush1.msra.mxu0 %v903
    %909 = vmatprep.subr.mxu0 0.0
    %910 = vmatpush1.msra.mxu0 0.0
    %911 = vmatprep.subr.mxu0 0.0
    %912 = vmatpush1.msra.mxu0 0.0
    %913 = vmatprep.subr.mxu0 0.0
    %914 = vmatpush1.msra.mxu0 0.0
    %915 = vmatprep.subr.mxu0 0.0
    %916 = vmatpush1.msra.mxu0 0.0
    %917 = vmatprep.subr.mxu0 0.0
    %918 = vmatpush1.msra.mxu0 0.0
    %919 = vmatprep.subr.mxu0 0.0
    %920 = vmatpush1.msra.mxu0 0.0
    %921 = vmatprep.subr.mxu0 0.0
    %922 = vmatpush1.msra.mxu0 0.0
    %923 = vmatprep.subr.mxu0 0.0
    %924 = vmatpush1.msra.mxu0 0.0
    %925 = vmatprep.subr.mxu0 0.0
    %926 = vmatpush1.msra.mxu0 0.0
    %927 = vmatprep.subr.mxu0 0.0
    %928 = vmatpush1.msra.mxu0 0.0
    %929 = vmatprep.subr.mxu0 0.0
    %930 = vmatpush1.msra.mxu0 0.0
    %931 = vmatprep.subr.mxu0 0.0
    %932 = vmatpush1.msra.mxu0 0.0
    %933 = vmatprep.subr.mxu0 0.0
    %934 = vmatpush1.msra.mxu0 0.0
    %935 = vmatprep.subr.mxu0 0.0
    %936 = vmatpush1.msra.mxu0 0.0
    %937 = vmatprep.subr.mxu0 0.0
    %938 = vmatpush1.msra.mxu0 0.0
    %939 = vmatprep.subr.mxu0 0.0
    %940 = vmatpush1.msra.mxu0 0.0
    %941 = vmatprep.subr.mxu0 0.0
    %942 = vmatpush1.msra.mxu0 0.0
    %943 = vmatprep.subr.mxu0 0.0
    %944 = vmatpush1.msra.mxu0 0.0
    %945 = vmatprep.subr.mxu0 0.0
    %946 = vmatpush1.msra.mxu0 0.0
    %947 = vmatprep.subr.mxu0 0.0
    %948 = vmatpush1.msra.mxu0 0.0
    %949 = vmatprep.subr.mxu0 0.0
    %950 = vmatpush1.msra.mxu0 0.0
    %951 = vmatprep.subr.mxu0 0.0
    %952 = vmatpush1.msra.mxu0 0.0
    %953 = vmatprep.subr.mxu0 0.0
    %954 = vmatpush1.msra.mxu0 0.0
    %955 = vmatprep.subr.mxu0 0.0
    %956 = vmatpush1.msra.mxu0 0.0
    %957 = vmatprep.subr.mxu0 0.0
    %958 = vmatpush1.msra.mxu0 0.0
    %959 = vmatprep.subr.mxu0 0.0
    %960 = vmatpush1.msra.mxu0 0.0
    %961 = vmatprep.subr.mxu0 0.0
    %962 = vmatpush1.msra.mxu0 0.0
    %963 = vmatprep.subr.mxu0 0.0
    %964 = vmatpush1.msra.mxu0 0.0
    %965 = vmatprep.subr.mxu0 0.0
    %966 = vmatpush1.msra.mxu0 0.0
    %967 = vmatprep.subr.mxu0 0.0
    %968 = vmatpush1.msra.mxu0 0.0
    %969 = vmatprep.subr.mxu0 0.0
    %970 = vmatpush1.msra.mxu0 0.0
    %971 = vmatprep.mubr.f32.mxu0 0.0
    %972 = vmatmul.mubr.f32.gmra.mrb[0].mxu0 %v905
    %v973 = vpop.f32.mrb[0].mxu0
    %v974 = vadd.f32 0.0, %v973
    %v975 = vpop.f32.mrb[0].mxu0
    %976 = vdwg.mxu0
    %978 = vrot.lane.b32.xlu0 %v370, 120
    %v979 = vpop.permute.xlu0 %978
    %v981 = vsel %vm389, %v889, 0
    %983 = vmatprep.subr.mxu0 0.0
    %984 = vmatpush1.msra.mxu0 %v979
    %985 = vmatprep.subr.mxu0 0.0
    %986 = vmatpush1.msra.mxu0 0.0
    %987 = vmatprep.subr.mxu0 0.0
    %988 = vmatpush1.msra.mxu0 0.0
    %989 = vmatprep.subr.mxu0 0.0
    %990 = vmatpush1.msra.mxu0 0.0
    %991 = vmatprep.subr.mxu0 0.0
    %992 = vmatpush1.msra.mxu0 0.0
    %993 = vmatprep.subr.mxu0 0.0
    %994 = vmatpush1.msra.mxu0 0.0
    %995 = vmatprep.subr.mxu0 0.0
    %996 = vmatpush1.msra.mxu0 0.0
    %997 = vmatprep.subr.mxu0 0.0
    %998 = vmatpush1.msra.mxu0 0.0
    %999 = vmatprep.subr.mxu0 0.0
    %1000 = vmatpush1.msra.mxu0 0.0
    %1001 = vmatprep.subr.mxu0 0.0
    %1002 = vmatpush1.msra.mxu0 0.0
    %1003 = vmatprep.subr.mxu0 0.0
    %1004 = vmatpush1.msra.mxu0 0.0
    %1005 = vmatprep.subr.mxu0 0.0
    %1006 = vmatpush1.msra.mxu0 0.0
    %1007 = vmatprep.subr.mxu0 0.0
    %1008 = vmatpush1.msra.mxu0 0.0
    %1009 = vmatprep.subr.mxu0 0.0
    %1010 = vmatpush1.msra.mxu0 0.0
    %1011 = vmatprep.subr.mxu0 0.0
    %1012 = vmatpush1.msra.mxu0 0.0
    %1013 = vmatprep.subr.mxu0 0.0
    %1014 = vmatpush1.msra.mxu0 0.0
    %1015 = vmatprep.subr.mxu0 0.0
    %1016 = vmatpush1.msra.mxu0 0.0
    %1017 = vmatprep.subr.mxu0 0.0
    %1018 = vmatpush1.msra.mxu0 0.0
    %1019 = vmatprep.subr.mxu0 0.0
    %1020 = vmatpush1.msra.mxu0 0.0
    %1021 = vmatprep.subr.mxu0 0.0
    %1022 = vmatpush1.msra.mxu0 0.0
    %1023 = vmatprep.subr.mxu0 0.0
    %1024 = vmatpush1.msra.mxu0 0.0
    %1025 = vmatprep.subr.mxu0 0.0
    %1026 = vmatpush1.msra.mxu0 0.0
    %1027 = vmatprep.subr.mxu0 0.0
    %1028 = vmatpush1.msra.mxu0 0.0
    %1029 = vmatprep.subr.mxu0 0.0
    %1030 = vmatpush1.msra.mxu0 0.0
    %1031 = vmatprep.subr.mxu0 0.0
    %1032 = vmatpush1.msra.mxu0 0.0
    %1033 = vmatprep.subr.mxu0 0.0
    %1034 = vmatpush1.msra.mxu0 0.0
    %1035 = vmatprep.subr.mxu0 0.0
    %1036 = vmatpush1.msra.mxu0 0.0
    %1037 = vmatprep.subr.mxu0 0.0
    %1038 = vmatpush1.msra.mxu0 0.0
    %1039 = vmatprep.subr.mxu0 0.0
    %1040 = vmatpush1.msra.mxu0 0.0
    %1041 = vmatprep.subr.mxu0 0.0
    %1042 = vmatpush1.msra.mxu0 0.0
    %1043 = vmatprep.subr.mxu0 0.0
    %1044 = vmatpush1.msra.mxu0 0.0
    %1045 = vmatprep.subr.mxu0 0.0
    %1046 = vmatpush1.msra.mxu0 0.0
    %1047 = vmatprep.mubr.f32.mxu0 0.0
    %1048 = vmatmul.mubr.f32.gmra.mrb[0].mxu0 %v981
    %v1049 = vpop.f32.mrb[0].mxu0
    %v1050 = vadd.f32 0.0, %v1049
    %v1051 = vpop.f32.mrb[0].mxu0
    %1052 = vdwg.mxu0
    %1053 = vrot.lane.b32.xlu0 %v199, 112
    %v1054 = vpop.permute.xlu0 %1053
    %1055 = vrot.lane.b32.xlu0 %v279, 112
    %v1056 = vpop.permute.xlu0 %1055
    %v1057 = vsel %vm389, %v1054, 0
    %v1059 = vsel %vm389, %v1056, 0
    %1061 = vmatprep.subr.mxu0 0.0
    %1062 = vmatpush1.xpose.msra.mxu0 %v1059
    %1063 = vmatprep.subr.mxu0 0.0
    %1064 = vmatpush1.xpose.msra.mxu0 0.0
    %1065 = vmatprep.subr.mxu0 0.0
    %1066 = vmatpush1.xpose.msra.mxu0 0.0
    %1067 = vmatprep.subr.mxu0 0.0
    %1068 = vmatpush1.xpose.msra.mxu0 0.0
    %1069 = vmatprep.subr.mxu0 0.0
    %1070 = vmatpush1.xpose.msra.mxu0 0.0
    %1071 = vmatprep.subr.mxu0 0.0
    %1072 = vmatpush1.xpose.msra.mxu0 0.0
    %1073 = vmatprep.subr.mxu0 0.0
    %1074 = vmatpush1.xpose.msra.mxu0 0.0
    %1075 = vmatprep.subr.mxu0 0.0
    %1076 = vmatpush1.xpose.msra.mxu0 0.0
    %1077 = vmatprep.subr.mxu0 0.0
    %1078 = vmatpush1.xpose.msra.mxu0 0.0
    %1079 = vmatprep.subr.mxu0 0.0
    %1080 = vmatpush1.xpose.msra.mxu0 0.0
    %1081 = vmatprep.subr.mxu0 0.0
    %1082 = vmatpush1.xpose.msra.mxu0 0.0
    %1083 = vmatprep.subr.mxu0 0.0
    %1084 = vmatpush1.xpose.msra.mxu0 0.0
    %1085 = vmatprep.subr.mxu0 0.0
    %1086 = vmatpush1.xpose.msra.mxu0 0.0
    %1087 = vmatprep.subr.mxu0 0.0
    %1088 = vmatpush1.xpose.msra.mxu0 0.0
    %1089 = vmatprep.subr.mxu0 0.0
    %1090 = vmatpush1.xpose.msra.mxu0 0.0
    %1091 = vmatprep.subr.mxu0 0.0
    %1092 = vmatpush1.xpose.msra.mxu0 0.0
    %1093 = vmatprep.subr.mxu0 0.0
    %1094 = vmatpush1.xpose.msra.mxu0 0.0
    %1095 = vmatprep.subr.mxu0 0.0
    %1096 = vmatpush1.xpose.msra.mxu0 0.0
    %1097 = vmatprep.subr.mxu0 0.0
    %1098 = vmatpush1.xpose.msra.mxu0 0.0
    %1099 = vmatprep.subr.mxu0 0.0
    %1100 = vmatpush1.xpose.msra.mxu0 0.0
    %1101 = vmatprep.subr.mxu0 0.0
    %1102 = vmatpush1.xpose.msra.mxu0 0.0
    %1103 = vmatprep.subr.mxu0 0.0
    %1104 = vmatpush1.xpose.msra.mxu0 0.0
    %1105 = vmatprep.subr.mxu0 0.0
    %1106 = vmatpush1.xpose.msra.mxu0 0.0
    %1107 = vmatprep.subr.mxu0 0.0
    %1108 = vmatpush1.xpose.msra.mxu0 0.0
    %1109 = vmatprep.subr.mxu0 0.0
    %1110 = vmatpush1.xpose.msra.mxu0 0.0
    %1111 = vmatprep.subr.mxu0 0.0
    %1112 = vmatpush1.xpose.msra.mxu0 0.0
    %1113 = vmatprep.subr.mxu0 0.0
    %1114 = vmatpush1.xpose.msra.mxu0 0.0
    %1115 = vmatprep.subr.mxu0 0.0
    %1116 = vmatpush1.xpose.msra.mxu0 0.0
    %1117 = vmatprep.subr.mxu0 0.0
    %1118 = vmatpush1.xpose.msra.mxu0 0.0
    %1119 = vmatprep.subr.mxu0 0.0
    %1120 = vmatpush1.xpose.msra.mxu0 0.0
    %1121 = vmatprep.subr.mxu0 0.0
    %1122 = vmatpush1.xpose.msra.mxu0 0.0
    %1123 = vmatprep.subr.mxu0 0.0
    %1124 = vmatpush1.xpose.msra.mxu0 0.0
    %1125 = vmatprep.mubr.f32.mxu0 0.0
    %1126 = vmatmul.mubr.f32.gmra.mrb[0].mxu0 %v1057
    %v1127 = vpop.f32.mrb[0].mxu0
    %v1128 = vadd.f32 %v382, %v1127
    %v1129 = vpop.f32.mrb[0].mxu0
    %1130 = vdwg.mxu0
    %1131 = vrot.lane.b32.xlu0 %v200, 112
    %v1132 = vpop.permute.xlu0 %1131
    %1133 = vrot.lane.b32.xlu0 %v284, 112
    %v1134 = vpop.permute.xlu0 %1133
    %v1135 = vsel %vm389, %v1132, 0
    %v1137 = vsel %vm389, %v1134, 0
    %1139 = vmatprep.subr.mxu0 0.0
    %1140 = vmatpush1.xpose.msra.mxu0 %v1137
    %1141 = vmatprep.subr.mxu0 0.0
    %1142 = vmatpush1.xpose.msra.mxu0 0.0
    %1143 = vmatprep.subr.mxu0 0.0
    %1144 = vmatpush1.xpose.msra.mxu0 0.0
    %1145 = vmatprep.subr.mxu0 0.0
    %1146 = vmatpush1.xpose.msra.mxu0 0.0
    %1147 = vmatprep.subr.mxu0 0.0
    %1148 = vmatpush1.xpose.msra.mxu0 0.0
    %1149 = vmatprep.subr.mxu0 0.0
    %1150 = vmatpush1.xpose.msra.mxu0 0.0
    %1151 = vmatprep.subr.mxu0 0.0
    %1152 = vmatpush1.xpose.msra.mxu0 0.0
    %1153 = vmatprep.subr.mxu0 0.0
    %1154 = vmatpush1.xpose.msra.mxu0 0.0
    %1155 = vmatprep.subr.mxu0 0.0
    %1156 = vmatpush1.xpose.msra.mxu0 0.0
    %1157 = vmatprep.subr.mxu0 0.0
    %1158 = vmatpush1.xpose.msra.mxu0 0.0
    %1159 = vmatprep.subr.mxu0 0.0
    %1160 = vmatpush1.xpose.msra.mxu0 0.0
    %1161 = vmatprep.subr.mxu0 0.0
    %1162 = vmatpush1.xpose.msra.mxu0 0.0
    %1163 = vmatprep.subr.mxu0 0.0
    %1164 = vmatpush1.xpose.msra.mxu0 0.0
    %1165 = vmatprep.subr.mxu0 0.0
    %1166 = vmatpush1.xpose.msra.mxu0 0.0
    %1167 = vmatprep.subr.mxu0 0.0
    %1168 = vmatpush1.xpose.msra.mxu0 0.0
    %1169 = vmatprep.subr.mxu0 0.0
    %1170 = vmatpush1.xpose.msra.mxu0 0.0
    %1171 = vmatprep.subr.mxu0 0.0
    %1172 = vmatpush1.xpose.msra.mxu0 0.0
    %1173 = vmatprep.subr.mxu0 0.0
    %1174 = vmatpush1.xpose.msra.mxu0 0.0
    %1175 = vmatprep.subr.mxu0 0.0
    %1176 = vmatpush1.xpose.msra.mxu0 0.0
    %1177 = vmatprep.subr.mxu0 0.0
    %1178 = vmatpush1.xpose.msra.mxu0 0.0
    %1179 = vmatprep.subr.mxu0 0.0
    %1180 = vmatpush1.xpose.msra.mxu0 0.0
    %1181 = vmatprep.subr.mxu0 0.0
    %1182 = vmatpush1.xpose.msra.mxu0 0.0
    %1183 = vmatprep.subr.mxu0 0.0
    %1184 = vmatpush1.xpose.msra.mxu0 0.0
    %1185 = vmatprep.subr.mxu0 0.0
    %1186 = vmatpush1.xpose.msra.mxu0 0.0
    %1187 = vmatprep.subr.mxu0 0.0
    %1188 = vmatpush1.xpose.msra.mxu0 0.0
    %1189 = vmatprep.subr.mxu0 0.0
    %1190 = vmatpush1.xpose.msra.mxu0 0.0
    %1191 = vmatprep.subr.mxu0 0.0
    %1192 = vmatpush1.xpose.msra.mxu0 0.0
    %1193 = vmatprep.subr.mxu0 0.0
    %1194 = vmatpush1.xpose.msra.mxu0 0.0
    %1195 = vmatprep.subr.mxu0 0.0
    %1196 = vmatpush1.xpose.msra.mxu0 0.0
    %1197 = vmatprep.subr.mxu0 0.0
    %1198 = vmatpush1.xpose.msra.mxu0 0.0
    %1199 = vmatprep.subr.mxu0 0.0
    %1200 = vmatpush1.xpose.msra.mxu0 0.0
    %1201 = vmatprep.subr.mxu0 0.0
    %1202 = vmatpush1.xpose.msra.mxu0 0.0
    %1203 = vmatprep.mubr.f32.mxu0 0.0
    %1204 = vmatmul.mubr.f32.gmra.mrb[0].mxu0 %v1135
    %v1205 = vpop.f32.mrb[0].mxu0
    %v1206 = vadd.f32 %v386, %v1205
    %v1207 = vpop.f32.mrb[0].mxu0
    %1208 = vdwg.mxu0
    %v1209 = vsel %vm389, %v1128, -inf
    %1210 = vmax.xlane.f32.xlu0 %v1209
    %v1211 = vpop.xlane.xlu0 %1210
    %v1212 = vsel %vm389, %v1206, -inf
    %1213 = vmax.xlane.f32.xlu0 %v1212
    %v1214 = vpop.xlane.xlu0 %1213
    %v1215 = vsub.f32 %v1128, %v1211
    %v1216 = vsub.f32 %v1206, %v1214
    %v1217 = vmul.f32 %v1215, 1.442695
    %v1218 = vpow.pop %v1217
    %v1219 = vmul.f32 %v1216, 1.442695
    %v1220 = vpow.pop %v1219
    %v1221 = vsel %vm389, %v1218, 0.0
    %1222 = vadd.xlane.f32.xlu0 %v1221
    %v1223 = vpop.xlane.xlu0 %1222
    %v1224 = vsel %vm389, %v1220, 0.0
    %1225 = vadd.xlane.f32.xlu0 %v1224
    %v1226 = vpop.xlane.xlu0 %1225
    %v1227 = vrcp.pop %v1223
    %v1228 = vmul.f32 %v1218, %v1227
    %v1229 = vrcp.pop %v1226
    %v1230 = vmul.f32 %v1220, %v1229
    %1233 = vrot.lane.b32.xlu0 %v1228, 16
    %v1234 = vpop.permute.xlu0 %1233
    %1235 = vrot.lane.b32.xlu0 %v1230, 16
    %v1236 = vpop.permute.xlu0 %1235
    %vm1239 = vcmask 195712
    %1240 = vst.msk [vmem:[#allocation9] sm:$0xff] %vm1239, %v1234
    %1241 = vst.msk [vmem:[#allocation9 + $0x8] sm:$0xff] %vm1239, %v1236
    %1242 = vrot.lane.b32.xlu0 %v365, 112
    %v1243 = vpop.permute.xlu0 %1242
    %v1245 = vsel %vm389, %v1228, 0
    %1247 = vmatprep.subr.mxu0 0.0
    %1248 = vmatpush1.msra.mxu0 %v1243
    %1249 = vmatprep.subr.mxu0 0.0
    %1250 = vmatpush1.msra.mxu0 0.0
    %1251 = vmatprep.subr.mxu0 0.0
    %1252 = vmatpush1.msra.mxu0 0.0
    %1253 = vmatprep.subr.mxu0 0.0
    %1254 = vmatpush1.msra.mxu0 0.0
    %1255 = vmatprep.subr.mxu0 0.0
    %1256 = vmatpush1.msra.mxu0 0.0
    %1257 = vmatprep.subr.mxu0 0.0
    %1258 = vmatpush1.msra.mxu0 0.0
    %1259 = vmatprep.subr.mxu0 0.0
    %1260 = vmatpush1.msra.mxu0 0.0
    %1261 = vmatprep.subr.mxu0 0.0
    %1262 = vmatpush1.msra.mxu0 0.0
    %1263 = vmatprep.subr.mxu0 0.0
    %1264 = vmatpush1.msra.mxu0 0.0
    %1265 = vmatprep.subr.mxu0 0.0
    %1266 = vmatpush1.msra.mxu0 0.0
    %1267 = vmatprep.subr.mxu0 0.0
    %1268 = vmatpush1.msra.mxu0 0.0
    %1269 = vmatprep.subr.mxu0 0.0
    %1270 = vmatpush1.msra.mxu0 0.0
    %1271 = vmatprep.subr.mxu0 0.0
    %1272 = vmatpush1.msra.mxu0 0.0
    %1273 = vmatprep.subr.mxu0 0.0
    %1274 = vmatpush1.msra.mxu0 0.0
    %1275 = vmatprep.subr.mxu0 0.0
    %1276 = vmatpush1.msra.mxu0 0.0
    %1277 = vmatprep.subr.mxu0 0.0
    %1278 = vmatpush1.msra.mxu0 0.0
    %1279 = vmatprep.subr.mxu0 0.0
    %1280 = vmatpush1.msra.mxu0 0.0
    %1281 = vmatprep.subr.mxu0 0.0
    %1282 = vmatpush1.msra.mxu0 0.0
    %1283 = vmatprep.subr.mxu0 0.0
    %1284 = vmatpush1.msra.mxu0 0.0
    %1285 = vmatprep.subr.mxu0 0.0
    %1286 = vmatpush1.msra.mxu0 0.0
    %1287 = vmatprep.subr.mxu0 0.0
    %1288 = vmatpush1.msra.mxu0 0.0
    %1289 = vmatprep.subr.mxu0 0.0
    %1290 = vmatpush1.msra.mxu0 0.0
    %1291 = vmatprep.subr.mxu0 0.0
    %1292 = vmatpush1.msra.mxu0 0.0
    %1293 = vmatprep.subr.mxu0 0.0
    %1294 = vmatpush1.msra.mxu0 0.0
    %1295 = vmatprep.subr.mxu0 0.0
    %1296 = vmatpush1.msra.mxu0 0.0
    %1297 = vmatprep.subr.mxu0 0.0
    %1298 = vmatpush1.msra.mxu0 0.0
    %1299 = vmatprep.subr.mxu0 0.0
    %1300 = vmatpush1.msra.mxu0 0.0
    %1301 = vmatprep.subr.mxu0 0.0
    %1302 = vmatpush1.msra.mxu0 0.0
    %1303 = vmatprep.subr.mxu0 0.0
    %1304 = vmatpush1.msra.mxu0 0.0
    %1305 = vmatprep.subr.mxu0 0.0
    %1306 = vmatpush1.msra.mxu0 0.0
    %1307 = vmatprep.subr.mxu0 0.0
    %1308 = vmatpush1.msra.mxu0 0.0
    %1309 = vmatprep.subr.mxu0 0.0
    %1310 = vmatpush1.msra.mxu0 0.0
    %1311 = vmatprep.mubr.f32.mxu0 0.0
    %1312 = vmatmul.mubr.f32.gmra.mrb[0].mxu0 %v1245
    %v1313 = vpop.f32.mrb[0].mxu0
    %v1314 = vadd.f32 0.0, %v1313
    %v1315 = vpop.f32.mrb[0].mxu0
    %1316 = vdwg.mxu0
    %1317 = vrot.lane.b32.xlu0 %v370, 112
    %v1318 = vpop.permute.xlu0 %1317
    %v1320 = vsel %vm389, %v1230, 0
    %1322 = vmatprep.subr.mxu0 0.0
    %1323 = vmatpush1.msra.mxu0 %v1318
    %1324 = vmatprep.subr.mxu0 0.0
    %1325 = vmatpush1.msra.mxu0 0.0
    %1326 = vmatprep.subr.mxu0 0.0
    %1327 = vmatpush1.msra.mxu0 0.0
    %1328 = vmatprep.subr.mxu0 0.0
    %1329 = vmatpush1.msra.mxu0 0.0
    %1330 = vmatprep.subr.mxu0 0.0
    %1331 = vmatpush1.msra.mxu0 0.0
    %1332 = vmatprep.subr.mxu0 0.0
    %1333 = vmatpush1.msra.mxu0 0.0
    %1334 = vmatprep.subr.mxu0 0.0
    %1335 = vmatpush1.msra.mxu0 0.0
    %1336 = vmatprep.subr.mxu0 0.0
    %1337 = vmatpush1.msra.mxu0 0.0
    %1338 = vmatprep.subr.mxu0 0.0
    %1339 = vmatpush1.msra.mxu0 0.0
    %1340 = vmatprep.subr.mxu0 0.0
    %1341 = vmatpush1.msra.mxu0 0.0
    %1342 = vmatprep.subr.mxu0 0.0
    %1343 = vmatpush1.msra.mxu0 0.0
    %1344 = vmatprep.subr.mxu0 0.0
    %1345 = vmatpush1.msra.mxu0 0.0
    %1346 = vmatprep.subr.mxu0 0.0
    %1347 = vmatpush1.msra.mxu0 0.0
    %1348 = vmatprep.subr.mxu0 0.0
    %1349 = vmatpush1.msra.mxu0 0.0
    %1350 = vmatprep.subr.mxu0 0.0
    %1351 = vmatpush1.msra.mxu0 0.0
    %1352 = vmatprep.subr.mxu0 0.0
    %1353 = vmatpush1.msra.mxu0 0.0
    %1354 = vmatprep.subr.mxu0 0.0
    %1355 = vmatpush1.msra.mxu0 0.0
    %1356 = vmatprep.subr.mxu0 0.0
    %1357 = vmatpush1.msra.mxu0 0.0
    %1358 = vmatprep.subr.mxu0 0.0
    %1359 = vmatpush1.msra.mxu0 0.0
    %1360 = vmatprep.subr.mxu0 0.0
    %1361 = vmatpush1.msra.mxu0 0.0
    %1362 = vmatprep.subr.mxu0 0.0
    %1363 = vmatpush1.msra.mxu0 0.0
    %1364 = vmatprep.subr.mxu0 0.0
    %1365 = vmatpush1.msra.mxu0 0.0
    %1366 = vmatprep.subr.mxu0 0.0
    %1367 = vmatpush1.msra.mxu0 0.0
    %1368 = vmatprep.subr.mxu0 0.0
    %1369 = vmatpush1.msra.mxu0 0.0
    %1370 = vmatprep.subr.mxu0 0.0
    %1371 = vmatpush1.msra.mxu0 0.0
    %1372 = vmatprep.subr.mxu0 0.0
    %1373 = vmatpush1.msra.mxu0 0.0
    %1374 = vmatprep.subr.mxu0 0.0
    %1375 = vmatpush1.msra.mxu0 0.0
    %1376 = vmatprep.subr.mxu0 0.0
    %1377 = vmatpush1.msra.mxu0 0.0
    %1378 = vmatprep.subr.mxu0 0.0
    %1379 = vmatpush1.msra.mxu0 0.0
    %1380 = vmatprep.subr.mxu0 0.0
    %1381 = vmatpush1.msra.mxu0 0.0
    %1382 = vmatprep.subr.mxu0 0.0
    %1383 = vmatpush1.msra.mxu0 0.0
    %1384 = vmatprep.subr.mxu0 0.0
    %1385 = vmatpush1.msra.mxu0 0.0
    %1386 = vmatprep.mubr.f32.mxu0 0.0
    %1387 = vmatmul.mubr.f32.gmra.mrb[0].mxu0 %v1320
    %v1388 = vpop.f32.mrb[0].mxu0
    %v1389 = vadd.f32 0.0, %v1388
    %v1390 = vpop.f32.mrb[0].mxu0
    %1391 = vdwg.mxu0
    %1392 = vrot.lane.b32.xlu0 %v199, 104
    %v1393 = vpop.permute.xlu0 %1392
    %1394 = vrot.lane.b32.xlu0 %v279, 104
    %v1395 = vpop.permute.xlu0 %1394
    %v1396 = vsel %vm389, %v1393, 0
    %v1398 = vsel %vm389, %v1395, 0
    %1400 = vmatprep.subr.mxu0 0.0
    %1401 = vmatpush1.xpose.msra.mxu0 %v1398
    %1402 = vmatprep.subr.mxu0 0.0
    %1403 = vmatpush1.xpose.msra.mxu0 0.0
    %1404 = vmatprep.subr.mxu0 0.0
    %1405 = vmatpush1.xpose.msra.mxu0 0.0
    %1406 = vmatprep.subr.mxu0 0.0
    %1407 = vmatpush1.xpose.msra.mxu0 0.0
    %1408 = vmatprep.subr.mxu0 0.0
    %1409 = vmatpush1.xpose.msra.mxu0 0.0
    %1410 = vmatprep.subr.mxu0 0.0
    %1411 = vmatpush1.xpose.msra.mxu0 0.0
    %1412 = vmatprep.subr.mxu0 0.0
    %1413 = vmatpush1.xpose.msra.mxu0 0.0
    %1414 = vmatprep.subr.mxu0 0.0
    %1415 = vmatpush1.xpose.msra.mxu0 0.0
    %1416 = vmatprep.subr.mxu0 0.0
    %1417 = vmatpush1.xpose.msra.mxu0 0.0
    %1418 = vmatprep.subr.mxu0 0.0
    %1419 = vmatpush1.xpose.msra.mxu0 0.0
    %1420 = vmatprep.subr.mxu0 0.0
    %1421 = vmatpush1.xpose.msra.mxu0 0.0
    %1422 = vmatprep.subr.mxu0 0.0
    %1423 = vmatpush1.xpose.msra.mxu0 0.0
    %1424 = vmatprep.subr.mxu0 0.0
    %1425 = vmatpush1.xpose.msra.mxu0 0.0
    %1426 = vmatprep.subr.mxu0 0.0
    %1427 = vmatpush1.xpose.msra.mxu0 0.0
    %1428 = vmatprep.subr.mxu0 0.0
    %1429 = vmatpush1.xpose.msra.mxu0 0.0
    %1430 = vmatprep.subr.mxu0 0.0
    %1431 = vmatpush1.xpose.msra.mxu0 0.0
    %1432 = vmatprep.subr.mxu0 0.0
    %1433 = vmatpush1.xpose.msra.mxu0 0.0
    %1434 = vmatprep.subr.mxu0 0.0
    %1435 = vmatpush1.xpose.msra.mxu0 0.0
    %1436 = vmatprep.subr.mxu0 0.0
    %1437 = vmatpush1.xpose.msra.mxu0 0.0
    %1438 = vmatprep.subr.mxu0 0.0
    %1439 = vmatpush1.xpose.msra.mxu0 0.0
    %1440 = vmatprep.subr.mxu0 0.0
    %1441 = vmatpush1.xpose.msra.mxu0 0.0
    %1442 = vmatprep.subr.mxu0 0.0
    %1443 = vmatpush1.xpose.msra.mxu0 0.0
    %1444 = vmatprep.subr.mxu0 0.0
    %1445 = vmatpush1.xpose.msra.mxu0 0.0
    %1446 = vmatprep.subr.mxu0 0.0
    %1447 = vmatpush1.xpose.msra.mxu0 0.0
    %1448 = vmatprep.subr.mxu0 0.0
    %1449 = vmatpush1.xpose.msra.mxu0 0.0
    %1450 = vmatprep.subr.mxu0 0.0
    %1451 = vmatpush1.xpose.msra.mxu0 0.0
    %1452 = vmatprep.subr.mxu0 0.0
    %1453 = vmatpush1.xpose.msra.mxu0 0.0
    %1454 = vmatprep.subr.mxu0 0.0
    %1455 = vmatpush1.xpose.msra.mxu0 0.0
    %1456 = vmatprep.subr.mxu0 0.0
    %1457 = vmatpush1.xpose.msra.mxu0 0.0
    %1458 = vmatprep.subr.mxu0 0.0
    %1459 = vmatpush1.xpose.msra.mxu0 0.0
    %1460 = vmatprep.subr.mxu0 0.0
    %1461 = vmatpush1.xpose.msra.mxu0 0.0
    %1462 = vmatprep.subr.mxu0 0.0
    %1463 = vmatpush1.xpose.msra.mxu0 0.0
    %1464 = vmatprep.mubr.f32.mxu0 0.0
    %1465 = vmatmul.mubr.f32.gmra.mrb[0].mxu0 %v1396
    %v1466 = vpop.f32.mrb[0].mxu0
    %v1467 = vadd.f32 %v382, %v1466
    %v1468 = vpop.f32.mrb[0].mxu0
    %1469 = vdwg.mxu0
    %1470 = vrot.lane.b32.xlu0 %v200, 104
    %v1471 = vpop.permute.xlu0 %1470
    %1472 = vrot.lane.b32.xlu0 %v284, 104
    %v1473 = vpop.permute.xlu0 %1472
    %v1474 = vsel %vm389, %v1471, 0
    %v1476 = vsel %vm389, %v1473, 0
    %1478 = vmatprep.subr.mxu0 0.0
    %1479 = vmatpush1.xpose.msra.mxu0 %v1476
    %1480 = vmatprep.subr.mxu0 0.0
    %1481 = vmatpush1.xpose.msra.mxu0 0.0
    %1482 = vmatprep.subr.mxu0 0.0
    %1483 = vmatpush1.xpose.msra.mxu0 0.0
    %1484 = vmatprep.subr.mxu0 0.0
    %1485 = vmatpush1.xpose.msra.mxu0 0.0
    %1486 = vmatprep.subr.mxu0 0.0
    %1487 = vmatpush1.xpose.msra.mxu0 0.0
    %1488 = vmatprep.subr.mxu0 0.0
    %1489 = vmatpush1.xpose.msra.mxu0 0.0
    %1490 = vmatprep.subr.mxu0 0.0
    %1491 = vmatpush1.xpose.msra.mxu0 0.0
    %1492 = vmatprep.subr.mxu0 0.0
    %1493 = vmatpush1.xpose.msra.mxu0 0.0
    %1494 = vmatprep.subr.mxu0 0.0
    %1495 = vmatpush1.xpose.msra.mxu0 0.0
    %1496 = vmatprep.subr.mxu0 0.0
    %1497 = vmatpush1.xpose.msra.mxu0 0.0
    %1498 = vmatprep.subr.mxu0 0.0
    %1499 = vmatpush1.xpose.msra.mxu0 0.0
    %1500 = vmatprep.subr.mxu0 0.0
    %1501 = vmatpush1.xpose.msra.mxu0 0.0
    %1502 = vmatprep.subr.mxu0 0.0
    %1503 = vmatpush1.xpose.msra.mxu0 0.0
    %1504 = vmatprep.subr.mxu0 0.0
    %1505 = vmatpush1.xpose.msra.mxu0 0.0
    %1506 = vmatprep.subr.mxu0 0.0
    %1507 = vmatpush1.xpose.msra.mxu0 0.0
    %1508 = vmatprep.subr.mxu0 0.0
    %1509 = vmatpush1.xpose.msra.mxu0 0.0
    %1510 = vmatprep.subr.mxu0 0.0
    %1511 = vmatpush1.xpose.msra.mxu0 0.0
    %1512 = vmatprep.subr.mxu0 0.0
    %1513 = vmatpush1.xpose.msra.mxu0 0.0
    %1514 = vmatprep.subr.mxu0 0.0
    %1515 = vmatpush1.xpose.msra.mxu0 0.0
    %1516 = vmatprep.subr.mxu0 0.0
    %1517 = vmatpush1.xpose.msra.mxu0 0.0
    %1518 = vmatprep.subr.mxu0 0.0
    %1519 = vmatpush1.xpose.msra.mxu0 0.0
    %1520 = vmatprep.subr.mxu0 0.0
    %1521 = vmatpush1.xpose.msra.mxu0 0.0
    %1522 = vmatprep.subr.mxu0 0.0
    %1523 = vmatpush1.xpose.msra.mxu0 0.0
    %1524 = vmatprep.subr.mxu0 0.0
    %1525 = vmatpush1.xpose.msra.mxu0 0.0
    %1526 = vmatprep.subr.mxu0 0.0
    %1527 = vmatpush1.xpose.msra.mxu0 0.0
    %1528 = vmatprep.subr.mxu0 0.0
    %1529 = vmatpush1.xpose.msra.mxu0 0.0
    %1530 = vmatprep.subr.mxu0 0.0
    %1531 = vmatpush1.xpose.msra.mxu0 0.0
    %1532 = vmatprep.subr.mxu0 0.0
    %1533 = vmatpush1.xpose.msra.mxu0 0.0
    %1534 = vmatprep.subr.mxu0 0.0
    %1535 = vmatpush1.xpose.msra.mxu0 0.0
    %1536 = vmatprep.subr.mxu0 0.0
    %1537 = vmatpush1.xpose.msra.mxu0 0.0
    %1538 = vmatprep.subr.mxu0 0.0
    %1539 = vmatpush1.xpose.msra.mxu0 0.0
    %1540 = vmatprep.subr.mxu0 0.0
    %1541 = vmatpush1.xpose.msra.mxu0 0.0
    %1542 = vmatprep.mubr.f32.mxu0 0.0
    %1543 = vmatmul.mubr.f32.gmra.mrb[0].mxu0 %v1474
    %v1544 = vpop.f32.mrb[0].mxu0
    %v1545 = vadd.f32 %v386, %v1544
    %v1546 = vpop.f32.mrb[0].mxu0
    %1547 = vdwg.mxu0
    %v1548 = vsel %vm389, %v1467, -inf
    %1549 = vmax.xlane.f32.xlu0 %v1548
    %v1550 = vpop.xlane.xlu0 %1549
    %v1551 = vsel %vm389, %v1545, -inf
    %1552 = vmax.xlane.f32.xlu0 %v1551
    %v1553 = vpop.xlane.xlu0 %1552
    %v1554 = vsub.f32 %v1467, %v1550
    %v1555 = vsub.f32 %v1545, %v1553
    %v1556 = vmul.f32 %v1554, 1.442695
    %v1557 = vpow.pop %v1556
    %v1558 = vmul.f32 %v1555, 1.442695
    %v1559 = vpow.pop %v1558
    %v1560 = vsel %vm389, %v1557, 0.0
    %1561 = vadd.xlane.f32.xlu0 %v1560
    %v1562 = vpop.xlane.xlu0 %1561
    %v1563 = vsel %vm389, %v1559, 0.0
    %1564 = vadd.xlane.f32.xlu0 %v1563
    %v1565 = vpop.xlane.xlu0 %1564
    %v1566 = vrcp.pop %v1562
    %v1567 = vmul.f32 %v1557, %v1566
    %v1568 = vrcp.pop %v1565
    %v1569 = vmul.f32 %v1559, %v1568
    %1572 = vrot.lane.b32.xlu0 %v1567, 24
    %v1573 = vpop.permute.xlu0 %1572
    %1574 = vrot.lane.b32.xlu0 %v1569, 24
    %v1575 = vpop.permute.xlu0 %1574
    %vm1578 = vcmask 261312
    %1579 = vst.msk [vmem:[#allocation9] sm:$0xff] %vm1578, %v1573
    %1580 = vst.msk [vmem:[#allocation9 + $0x8] sm:$0xff] %vm1578, %v1575
    %1581 = vrot.lane.b32.xlu0 %v365, 104
    %v1582 = vpop.permute.xlu0 %1581
    %v1584 = vsel %vm389, %v1567, 0
    %1586 = vmatprep.subr.mxu0 0.0
    %1587 = vmatpush1.msra.mxu0 %v1582
    %1588 = vmatprep.subr.mxu0 0.0
    %1589 = vmatpush1.msra.mxu0 0.0
    %1590 = vmatprep.subr.mxu0 0.0
    %1591 = vmatpush1.msra.mxu0 0.0
    %1592 = vmatprep.subr.mxu0 0.0
    %1593 = vmatpush1.msra.mxu0 0.0
    %1594 = vmatprep.subr.mxu0 0.0
    %1595 = vmatpush1.msra.mxu0 0.0
    %1596 = vmatprep.subr.mxu0 0.0
    %1597 = vmatpush1.msra.mxu0 0.0
    %1598 = vmatprep.subr.mxu0 0.0
    %1599 = vmatpush1.msra.mxu0 0.0
    %1600 = vmatprep.subr.mxu0 0.0
    %1601 = vmatpush1.msra.mxu0 0.0
    %1602 = vmatprep.subr.mxu0 0.0
    %1603 = vmatpush1.msra.mxu0 0.0
    %1604 = vmatprep.subr.mxu0 0.0
    %1605 = vmatpush1.msra.mxu0 0.0
    %1606 = vmatprep.subr.mxu0 0.0
    %1607 = vmatpush1.msra.mxu0 0.0
    %1608 = vmatprep.subr.mxu0 0.0
    %1609 = vmatpush1.msra.mxu0 0.0
    %1610 = vmatprep.subr.mxu0 0.0
    %1611 = vmatpush1.msra.mxu0 0.0
    %1612 = vmatprep.subr.mxu0 0.0
    %1613 = vmatpush1.msra.mxu0 0.0
    %1614 = vmatprep.subr.mxu0 0.0
    %1615 = vmatpush1.msra.mxu0 0.0
    %1616 = vmatprep.subr.mxu0 0.0
    %1617 = vmatpush1.msra.mxu0 0.0
    %1618 = vmatprep.subr.mxu0 0.0
    %1619 = vmatpush1.msra.mxu0 0.0
    %1620 = vmatprep.subr.mxu0 0.0
    %1621 = vmatpush1.msra.mxu0 0.0
    %1622 = vmatprep.subr.mxu0 0.0
    %1623 = vmatpush1.msra.mxu0 0.0
    %1624 = vmatprep.subr.mxu0 0.0
    %1625 = vmatpush1.msra.mxu0 0.0
    %1626 = vmatprep.subr.mxu0 0.0
    %1627 = vmatpush1.msra.mxu0 0.0
    %1628 = vmatprep.subr.mxu0 0.0
    %1629 = vmatpush1.msra.mxu0 0.0
    %1630 = vmatprep.subr.mxu0 0.0
    %1631 = vmatpush1.msra.mxu0 0.0
    %1632 = vmatprep.subr.mxu0 0.0
    %1633 = vmatpush1.msra.mxu0 0.0
    %1634 = vmatprep.subr.mxu0 0.0
    %1635 = vmatpush1.msra.mxu0 0.0
    %1636 = vmatprep.subr.mxu0 0.0
    %1637 = vmatpush1.msra.mxu0 0.0
    %1638 = vmatprep.subr.mxu0 0.0
    %1639 = vmatpush1.msra.mxu0 0.0
    %1640 = vmatprep.subr.mxu0 0.0
    %1641 = vmatpush1.msra.mxu0 0.0
    %1642 = vmatprep.subr.mxu0 0.0
    %1643 = vmatpush1.msra.mxu0 0.0
    %1644 = vmatprep.subr.mxu0 0.0
    %1645 = vmatpush1.msra.mxu0 0.0
    %1646 = vmatprep.subr.mxu0 0.0
    %1647 = vmatpush1.msra.mxu0 0.0
    %1648 = vmatprep.subr.mxu0 0.0
    %1649 = vmatpush1.msra.mxu0 0.0
    %1650 = vmatprep.mubr.f32.mxu0 0.0
    %1651 = vmatmul.mubr.f32.gmra.mrb[0].mxu0 %v1584
    %v1652 = vpop.f32.mrb[0].mxu0
    %v1653 = vadd.f32 0.0, %v1652
    %v1654 = vpop.f32.mrb[0].mxu0
    %1655 = vdwg.mxu0
    %1656 = vrot.lane.b32.xlu0 %v370, 104
    %v1657 = vpop.permute.xlu0 %1656
    %v1659 = vsel %vm389, %v1569, 0
    %1661 = vmatprep.subr.mxu0 0.0
    %1662 = vmatpush1.msra.mxu0 %v1657
    %1663 = vmatprep.subr.mxu0 0.0
    %1664 = vmatpush1.msra.mxu0 0.0
    %1665 = vmatprep.subr.mxu0 0.0
    %1666 = vmatpush1.msra.mxu0 0.0
    %1667 = vmatprep.subr.mxu0 0.0
    %1668 = vmatpush1.msra.mxu0 0.0
    %1669 = vmatprep.subr.mxu0 0.0
    %1670 = vmatpush1.msra.mxu0 0.0
    %1671 = vmatprep.subr.mxu0 0.0
    %1672 = vmatpush1.msra.mxu0 0.0
    %1673 = vmatprep.subr.mxu0 0.0
    %1674 = vmatpush1.msra.mxu0 0.0
    %1675 = vmatprep.subr.mxu0 0.0
    %1676 = vmatpush1.msra.mxu0 0.0
    %1677 = vmatprep.subr.mxu0 0.0
    %1678 = vmatpush1.msra.mxu0 0.0
    %1679 = vmatprep.subr.mxu0 0.0
    %1680 = vmatpush1.msra.mxu0 0.0
    %1681 = vmatprep.subr.mxu0 0.0
    %1682 = vmatpush1.msra.mxu0 0.0
    %1683 = vmatprep.subr.mxu0 0.0
    %1684 = vmatpush1.msra.mxu0 0.0
    %1685 = vmatprep.subr.mxu0 0.0
    %1686 = vmatpush1.msra.mxu0 0.0
    %1687 = vmatprep.subr.mxu0 0.0
    %1688 = vmatpush1.msra.mxu0 0.0
    %1689 = vmatprep.subr.mxu0 0.0
    %1690 = vmatpush1.msra.mxu0 0.0
    %1691 = vmatprep.subr.mxu0 0.0
    %1692 = vmatpush1.msra.mxu0 0.0
    %1693 = vmatprep.subr.mxu0 0.0
    %1694 = vmatpush1.msra.mxu0 0.0
    %1695 = vmatprep.subr.mxu0 0.0
    %1696 = vmatpush1.msra.mxu0 0.0
    %1697 = vmatprep.subr.mxu0 0.0
    %1698 = vmatpush1.msra.mxu0 0.0
    %1699 = vmatprep.subr.mxu0 0.0
    %1700 = vmatpush1.msra.mxu0 0.0
    %1701 = vmatprep.subr.mxu0 0.0
    %1702 = vmatpush1.msra.mxu0 0.0
    %1703 = vmatprep.subr.mxu0 0.0
    %1704 = vmatpush1.msra.mxu0 0.0
    %1705 = vmatprep.subr.mxu0 0.0
    %1706 = vmatpush1.msra.mxu0 0.0
    %1707 = vmatprep.subr.mxu0 0.0
    %1708 = vmatpush1.msra.mxu0 0.0
    %1709 = vmatprep.subr.mxu0 0.0
    %1710 = vmatpush1.msra.mxu0 0.0
    %1711 = vmatprep.subr.mxu0 0.0
    %1712 = vmatpush1.msra.mxu0 0.0
    %1713 = vmatprep.subr.mxu0 0.0
    %1714 = vmatpush1.msra.mxu0 0.0
    %1715 = vmatprep.subr.mxu0 0.0
    %1716 = vmatpush1.msra.mxu0 0.0
    %1717 = vmatprep.subr.mxu0 0.0
    %1718 = vmatpush1.msra.mxu0 0.0
    %1719 = vmatprep.subr.mxu0 0.0
    %1720 = vmatpush1.msra.mxu0 0.0
    %1721 = vmatprep.subr.mxu0 0.0
    %1722 = vmatpush1.msra.mxu0 0.0
    %1723 = vmatprep.subr.mxu0 0.0
    %1724 = vmatpush1.msra.mxu0 0.0
    %1725 = vmatprep.mubr.f32.mxu0 0.0
    %1726 = vmatmul.mubr.f32.gmra.mrb[0].mxu0 %v1659
    %v1727 = vpop.f32.mrb[0].mxu0
    %v1728 = vadd.f32 0.0, %v1727
    %v1729 = vpop.f32.mrb[0].mxu0
    %1730 = vdwg.mxu0
    %1733 = vrot.lane.b32.xlu0 %v974, 8
    %v1734 = vpop.permute.xlu0 %1733
    %1735 = vrot.lane.b32.xlu0 %v1050, 8
    %v1736 = vpop.permute.xlu0 %1735
    %1741 = vrot.lane.b32.xlu0 %v1314, 16
    %v1742 = vpop.permute.xlu0 %1741
    %1743 = vrot.lane.b32.xlu0 %v1389, 16
    %v1744 = vpop.permute.xlu0 %1743
    %1749 = vrot.lane.b32.xlu0 %v1653, 24
    %v1750 = vpop.permute.xlu0 %1749
    %1751 = vrot.lane.b32.xlu0 %v1728, 24
    %v1752 = vpop.permute.xlu0 %1751
    %v1755 = vsel %vm389, %v636, %v1734
    %v1756 = vsel %vm389, %v709, %v1736
    %vm1757 = vcmask 130048
    %v1758 = vsel %vm1757, %v1755, %v1742
    %v1759 = vsel %vm1757, %v1756, %v1744
    %vm1760 = vcmask 195584
    %v1761 = vsel %vm1760, %v1758, %v1750
    %v1762 = vsel %vm1760, %v1759, %v1752
    %v1763 = vld [vmem:[#allocation5] sm:$0xff]
    %v1764 = vld [vmem:[#allocation5 + $0x8] sm:$0xff]
    %v1765 = vld [vmem:[#allocation5 + $0x10] sm:$0xff]
    %v1766 = vld [vmem:[#allocation5 + $0x18] sm:$0xff]
    %v1767 = vld [vmem:[%s9] sm:$0x1]
    %v1769 = vlaneseq
    %v1770 = vshrl.u32 %v1769, 7
    %v1771 = vsub.s32 0, %v1770
    %v1772 = vrot.slane %v1767, %v1771
    %v1775 = vsel %vm117, %v1761, 0
    %v1778 = vsel %vm117, %v1762, 0
    %1780 = vmatprep.subr.mxu0 0.0
    %1781 = vmatpush1.msra.mxu0 %v1763
    %1782 = vmatprep.subr.mxu0 0.0
    %1783 = vmatpush1.msra.mxu0 %v1764
    %1784 = vmatprep.subr.mxu0 0.0
    %1785 = vmatpush1.msra.mxu0 %v1765
    %1786 = vmatprep.subr.mxu0 0.0
    %1787 = vmatpush1.msra.mxu0 %v1766
    %1788 = vmatprep.subr.mxu0 0.0
    %1789 = vmatpush1.msra.mxu0 0.0
    %1790 = vmatprep.subr.mxu0 0.0
    %1791 = vmatpush1.msra.mxu0 0.0
    %1792 = vmatprep.subr.mxu0 0.0
    %1793 = vmatpush1.msra.mxu0 0.0
    %1794 = vmatprep.subr.mxu0 0.0
    %1795 = vmatpush1.msra.mxu0 0.0
    %1796 = vmatprep.subr.mxu0 0.0
    %1797 = vmatpush1.msra.mxu0 0.0
    %1798 = vmatprep.subr.mxu0 0.0
    %1799 = vmatpush1.msra.mxu0 0.0
    %1800 = vmatprep.subr.mxu0 0.0
    %1801 = vmatpush1.msra.mxu0 0.0
    %1802 = vmatprep.subr.mxu0 0.0
    %1803 = vmatpush1.msra.mxu0 0.0
    %1804 = vmatprep.subr.mxu0 0.0
    %1805 = vmatpush1.msra.mxu0 0.0
    %1806 = vmatprep.subr.mxu0 0.0
    %1807 = vmatpush1.msra.mxu0 0.0
    %1808 = vmatprep.subr.mxu0 0.0
    %1809 = vmatpush1.msra.mxu0 0.0
    %1810 = vmatprep.subr.mxu0 0.0
    %1811 = vmatpush1.msra.mxu0 0.0
    %1812 = vmatprep.subr.mxu0 0.0
    %1813 = vmatpush1.msra.mxu0 0.0
    %1814 = vmatprep.subr.mxu0 0.0
    %1815 = vmatpush1.msra.mxu0 0.0
    %1816 = vmatprep.subr.mxu0 0.0
    %1817 = vmatpush1.msra.mxu0 0.0
    %1818 = vmatprep.subr.mxu0 0.0
    %1819 = vmatpush1.msra.mxu0 0.0
    %1820 = vmatprep.subr.mxu0 0.0
    %1821 = vmatpush1.msra.mxu0 0.0
    %1822 = vmatprep.subr.mxu0 0.0
    %1823 = vmatpush1.msra.mxu0 0.0
    %1824 = vmatprep.subr.mxu0 0.0
    %1825 = vmatpush1.msra.mxu0 0.0
    %1826 = vmatprep.subr.mxu0 0.0
    %1827 = vmatpush1.msra.mxu0 0.0
    %1828 = vmatprep.subr.mxu0 0.0
    %1829 = vmatpush1.msra.mxu0 0.0
    %1830 = vmatprep.subr.mxu0 0.0
    %1831 = vmatpush1.msra.mxu0 0.0
    %1832 = vmatprep.subr.mxu0 0.0
    %1833 = vmatpush1.msra.mxu0 0.0
    %1834 = vmatprep.subr.mxu0 0.0
    %1835 = vmatpush1.msra.mxu0 0.0
    %1836 = vmatprep.subr.mxu0 0.0
    %1837 = vmatpush1.msra.mxu0 0.0
    %1838 = vmatprep.subr.mxu0 0.0
    %1839 = vmatpush1.msra.mxu0 0.0
    %1840 = vmatprep.subr.mxu0 0.0
    %1841 = vmatpush1.msra.mxu0 0.0
    %1842 = vmatprep.subr.mxu0 0.0
    %1843 = vmatpush1.msra.mxu0 0.0
    %1844 = vmatprep.mubr.f32.mxu0 0.0
    %1845 = vmatmul.mubr.f32.gmra.mrb[0].mxu0 %v1775
    %v1846 = vpop.f32.mrb[0].mxu0
    %v1847 = vadd.f32 %v1772, %v1846
    %v1848 = vpop.f32.mrb[0].mxu0
    %1849 = vmatprep.mubr.f32.mxu0 0.0
    %1850 = vmatmul.mubr.f32.gmra.mrb[0].mxu0 %v1778
    %v1851 = vpop.f32.mrb[0].mxu0
    %v1852 = vadd.f32 %v1772, %v1851
    %v1853 = vpop.f32.mrb[0].mxu0
    %1854 = vdwg.mxu0
    %v1855 = vadd.f32 %v1847, %v104
    %v1856 = vadd.f32 %v1852, %v105
    %v1857 = vld [vmem:[%s10] sm:$0x1]
    %v1858 = vld [vmem:[%s11] sm:$0x1]
    %v1859 = vsel %vm117, %v1855, 0.0
    %1860 = vadd.xlane.f32.xlu0 %v1859
    %v1861 = vpop.xlane.xlu0 %1860
    %v1862 = vsel %vm117, %v1856, 0.0
    %1863 = vadd.xlane.f32.xlu0 %v1862
    %v1864 = vpop.xlane.xlu0 %1863
    %v1865 = vrcp.pop 32.0
    %v1866 = vmul.f32 %v1861, %v1865
    %v1867 = vmul.f32 %v1864, %v1865
    %v1868 = vsub.f32 %v1855, %v1866
    %v1869 = vsub.f32 %v1856, %v1867
    %v1870 = vmul.f32 %v1868, %v1868
    %v1871 = vmul.f32 %v1869, %v1869
    %v1872 = vsel %vm117, %v1870, 0.0
    %1873 = vadd.xlane.f32.xlu0 %v1872
    %v1874 = vpop.xlane.xlu0 %1873
    %v1875 = vsel %vm117, %v1871, 0.0
    %1876 = vadd.xlane.f32.xlu0 %v1875
    %v1877 = vpop.xlane.xlu0 %1876
    %v1878 = vmul.f32 %v1874, %v1865
    %v1879 = vmul.f32 %v1877, %v1865
    %v1880 = vadd.f32 %v1878, 1e-05
    %v1881 = vadd.f32 %v1879, 1e-05
    %v1882 = vrsqrt.pop %v1880
    %v1883 = vrsqrt.pop %v1881
    %v1884 = vmul.f32 %v1868, %v1882
    %v1885 = vmul.f32 %v1869, %v1883
    %v1887 = vlaneseq
    %v1888 = vshrl.u32 %v1887, 7
    %v1889 = vsub.s32 0, %v1888
    %v1890 = vrot.slane %v1857, %v1889
    %v1892 = vmul.f32 %v1884, %v1890
    %v1893 = vmul.f32 %v1885, %v1890
    %v1895 = vlaneseq
    %v1896 = vshrl.u32 %v1895, 7
    %v1897 = vsub.s32 0, %v1896
    %v1898 = vrot.slane %v1858, %v1897
    %v1900 = vadd.f32 %v1892, %v1898
    %v1901 = vadd.f32 %v1893, %v1898
    %v1902 = vld [vmem:[#allocation7] sm:$0xff]
    %v1903 = vld [vmem:[#allocation7 + $0x8] sm:$0xff]
    %v1904 = vld [vmem:[#allocation7 + $0x10] sm:$0xff]
    %v1905 = vld [vmem:[#allocation7 + $0x18] sm:$0xff]
    %v1906 = vld [vmem:[%s13] sm:$0x1]
    %v1908 = vlaneseq
    %v1909 = vshrl.u32 %v1908, 7
    %v1910 = vsub.s32 0, %v1909
    %v1911 = vrot.slane %v1906, %v1910
    %v1914 = vsel %vm117, %v1900, 0
    %v1917 = vsel %vm117, %v1901, 0
    %1919 = vmatprep.subr.mxu0 0.0
    %1920 = vmatpush1.msra.mxu0 %v1902
    %1921 = vmatprep.subr.mxu0 0.0
    %1922 = vmatpush1.msra.mxu0 %v1903
    %1923 = vmatprep.subr.mxu0 0.0
    %1924 = vmatpush1.msra.mxu0 %v1904
    %1925 = vmatprep.subr.mxu0 0.0
    %1926 = vmatpush1.msra.mxu0 %v1905
    %1927 = vmatprep.subr.mxu0 0.0
    %1928 = vmatpush1.msra.mxu0 0.0
    %1929 = vmatprep.subr.mxu0 0.0
    %1930 = vmatpush1.msra.mxu0 0.0
    %1931 = vmatprep.subr.mxu0 0.0
    %1932 = vmatpush1.msra.mxu0 0.0
    %1933 = vmatprep.subr.mxu0 0.0
    %1934 = vmatpush1.msra.mxu0 0.0
    %1935 = vmatprep.subr.mxu0 0.0
    %1936 = vmatpush1.msra.mxu0 0.0
    %1937 = vmatprep.subr.mxu0 0.0
    %1938 = vmatpush1.msra.mxu0 0.0
    %1939 = vmatprep.subr.mxu0 0.0
    %1940 = vmatpush1.msra.mxu0 0.0
    %1941 = vmatprep.subr.mxu0 0.0
    %1942 = vmatpush1.msra.mxu0 0.0
    %1943 = vmatprep.subr.mxu0 0.0
    %1944 = vmatpush1.msra.mxu0 0.0
    %1945 = vmatprep.subr.mxu0 0.0
    %1946 = vmatpush1.msra.mxu0 0.0
    %1947 = vmatprep.subr.mxu0 0.0
    %1948 = vmatpush1.msra.mxu0 0.0
    %1949 = vmatprep.subr.mxu0 0.0
    %1950 = vmatpush1.msra.mxu0 0.0
    %1951 = vmatprep.subr.mxu0 0.0
    %1952 = vmatpush1.msra.mxu0 0.0
    %1953 = vmatprep.subr.mxu0 0.0
    %1954 = vmatpush1.msra.mxu0 0.0
    %1955 = vmatprep.subr.mxu0 0.0
    %1956 = vmatpush1.msra.mxu0 0.0
    %1957 = vmatprep.subr.mxu0 0.0
    %1958 = vmatpush1.msra.mxu0 0.0
    %1959 = vmatprep.subr.mxu0 0.0
    %1960 = vmatpush1.msra.mxu0 0.0
    %1961 = vmatprep.subr.mxu0 0.0
    %1962 = vmatpush1.msra.mxu0 0.0
    %1963 = vmatprep.subr.mxu0 0.0
    %1964 = vmatpush1.msra.mxu0 0.0
    %1965 = vmatprep.subr.mxu0 0.0
    %1966 = vmatpush1.msra.mxu0 0.0
    %1967 = vmatprep.subr.mxu0 0.0
    %1968 = vmatpush1.msra.mxu0 0.0
    %1969 = vmatprep.subr.mxu0 0.0
    %1970 = vmatpush1.msra.mxu0 0.0
    %1971 = vmatprep.subr.mxu0 0.0
    %1972 = vmatpush1.msra.mxu0 0.0
    %1973 = vmatprep.subr.mxu0 0.0
    %1974 = vmatpush1.msra.mxu0 0.0
    %1975 = vmatprep.subr.mxu0 0.0
    %1976 = vmatpush1.msra.mxu0 0.0
    %1977 = vmatprep.subr.mxu0 0.0
    %1978 = vmatpush1.msra.mxu0 0.0
    %1979 = vmatprep.subr.mxu0 0.0
    %1980 = vmatpush1.msra.mxu0 0.0
    %1981 = vmatprep.subr.mxu0 0.0
    %1982 = vmatpush1.msra.mxu0 0.0
    %1983 = vmatprep.mubr.f32.mxu0 0.0
    %1984 = vmatmul.mubr.f32.gmra.mrb[0].mxu0 %v1914
    %v1985 = vpop.f32.mrb[0].mxu0
    %v1986 = vadd.f32 %v1911, %v1985
    %v1987 = vpop.f32.mrb[0].mxu0
    %1988 = vmatprep.mubr.f32.mxu0 0.0
    %1989 = vmatmul.mubr.f32.gmra.mrb[0].mxu0 %v1917
    %v1990 = vpop.f32.mrb[0].mxu0
    %v1991 = vadd.f32 %v1911, %v1990
    %v1992 = vpop.f32.mrb[0].mxu0
    %1993 = vdwg.mxu0
    %v1994 = vmax.f32 %v1986, 0.0
    %v1995 = vmax.f32 %v1991, 0.0
    %v1996 = vld [vmem:[%s14] sm:$0xff]
    %v1997 = vld [vmem:[%s14 + $0x8] sm:$0xff]
    %v1998 = vld [vmem:[%s14 + $0x10] sm:$0xff]
    %v1999 = vld [vmem:[%s14 + $0x18] sm:$0xff]
    %v2000 = vld [vmem:[%s14 + $0x20] sm:$0xff]
    %v2001 = vld [vmem:[%s14 + $0x28] sm:$0xff]
    %v2002 = vld [vmem:[%s14 + $0x30] sm:$0xff]
    %v2003 = vld [vmem:[%s14 + $0x38] sm:$0xff]
    %v2004 = vld [vmem:[%s15] sm:$0x1]
    %v2006 = vlaneseq
    %v2007 = vshrl.u32 %v2006, 7
    %v2008 = vsub.s32 0, %v2007
    %v2009 = vrot.slane %v2004, %v2008
    %vm2011 = vcmask 523264
    %v2013 = vsel %vm2011, %v1994, 0
    %v2016 = vsel %vm2011, %v1995, 0
    %2018 = vmatprep.subr.mxu0 0.0
    %2019 = vmatpush1.msra.mxu0 %v1996
    %2020 = vmatprep.subr.mxu0 0.0
    %2021 = vmatpush1.msra.mxu0 %v1997
    %2022 = vmatprep.subr.mxu0 0.0
    %2023 = vmatpush1.msra.mxu0 %v1998
    %2024 = vmatprep.subr.mxu0 0.0
    %2025 = vmatpush1.msra.mxu0 %v1999
    %2026 = vmatprep.subr.mxu0 0.0
    %2027 = vmatpush1.msra.mxu0 %v2000
    %2028 = vmatprep.subr.mxu0 0.0
    %2029 = vmatpush1.msra.mxu0 %v2001
    %2030 = vmatprep.subr.mxu0 0.0
    %2031 = vmatpush1.msra.mxu0 %v2002
    %2032 = vmatprep.subr.mxu0 0.0
    %2033 = vmatpush1.msra.mxu0 %v2003
    %2034 = vmatprep.subr.mxu0 0.0
    %2035 = vmatpush1.msra.mxu0 0.0
    %2036 = vmatprep.subr.mxu0 0.0
    %2037 = vmatpush1.msra.mxu0 0.0
    %2038 = vmatprep.subr.mxu0 0.0
    %2039 = vmatpush1.msra.mxu0 0.0
    %2040 = vmatprep.subr.mxu0 0.0
    %2041 = vmatpush1.msra.mxu0 0.0
    %2042 = vmatprep.subr.mxu0 0.0
    %2043 = vmatpush1.msra.mxu0 0.0
    %2044 = vmatprep.subr.mxu0 0.0
    %2045 = vmatpush1.msra.mxu0 0.0
    %2046 = vmatprep.subr.mxu0 0.0
    %2047 = vmatpush1.msra.mxu0 0.0
    %2048 = vmatprep.subr.mxu0 0.0
    %2049 = vmatpush1.msra.mxu0 0.0
    %2050 = vmatprep.subr.mxu0 0.0
    %2051 = vmatpush1.msra.mxu0 0.0
    %2052 = vmatprep.subr.mxu0 0.0
    %2053 = vmatpush1.msra.mxu0 0.0
    %2054 = vmatprep.subr.mxu0 0.0
    %2055 = vmatpush1.msra.mxu0 0.0
    %2056 = vmatprep.subr.mxu0 0.0
    %2057 = vmatpush1.msra.mxu0 0.0
    %2058 = vmatprep.subr.mxu0 0.0
    %2059 = vmatpush1.msra.mxu0 0.0
    %2060 = vmatprep.subr.mxu0 0.0
    %2061 = vmatpush1.msra.mxu0 0.0
    %2062 = vmatprep.subr.mxu0 0.0
    %2063 = vmatpush1.msra.mxu0 0.0
    %2064 = vmatprep.subr.mxu0 0.0
    %2065 = vmatpush1.msra.mxu0 0.0
    %2066 = vmatprep.subr.mxu0 0.0
    %2067 = vmatpush1.msra.mxu0 0.0
    %2068 = vmatprep.subr.mxu0 0.0
    %2069 = vmatpush1.msra.mxu0 0.0
    %2070 = vmatprep.subr.mxu0 0.0
    %2071 = vmatpush1.msra.mxu0 0.0
    %2072 = vmatprep.subr.mxu0 0.0
    %2073 = vmatpush1.msra.mxu0 0.0
    %2074 = vmatprep.subr.mxu0 0.0
    %2075 = vmatpush1.msra.mxu0 0.0
    %2076 = vmatprep.subr.mxu0 0.0
    %2077 = vmatpush1.msra.mxu0 0.0
    %2078 = vmatprep.subr.mxu0 0.0
    %2079 = vmatpush1.msra.mxu0 0.0
    %2080 = vmatprep.subr.mxu0 0.0
    %2081 = vmatpush1.msra.mxu0 0.0
    %2082 = vmatprep.mubr.f32.mxu0 0.0
    %2083 = vmatmul.mubr.f32.gmra.mrb[0].mxu0 %v2013
    %v2084 = vpop.f32.mrb[0].mxu0
    %v2085 = vadd.f32 %v2009, %v2084
    %v2086 = vpop.f32.mrb[0].mxu0
    %2087 = vmatprep.mubr.f32.mxu0 0.0
    %2088 = vmatmul.mubr.f32.gmra.mrb[0].mxu0 %v2016
    %v2089 = vpop.f32.mrb[0].mxu0
    %v2090 = vadd.f32 %v2009, %v2089
    %v2091 = vpop.f32.mrb[0].mxu0
    %2092 = vdwg.mxu0
    %v2093 = vadd.f32 %v2085, %v1900
    %v2094 = vadd.f32 %v2090, %v1901
    %v2095 = vld [vmem:[%s16] sm:$0x1]
    %v2096 = vld [vmem:[%s17] sm:$0x1]
    %v2097 = vsel %vm117, %v2093, 0.0
    %2098 = vadd.xlane.f32.xlu0 %v2097
    %v2099 = vpop.xlane.xlu0 %2098
    %v2100 = vsel %vm117, %v2094, 0.0
    %2101 = vadd.xlane.f32.xlu0 %v2100
    %v2102 = vpop.xlane.xlu0 %2101
    %v2103 = vmul.f32 %v2099, %v1865
    %v2104 = vmul.f32 %v2102, %v1865
    %v2105 = vsub.f32 %v2093, %v2103
    %v2106 = vsub.f32 %v2094, %v2104
    %v2107 = vmul.f32 %v2105, %v2105
    %v2108 = vmul.f32 %v2106, %v2106
    %v2109 = vsel %vm117, %v2107, 0.0
    %2110 = vadd.xlane.f32.xlu0 %v2109
    %v2111 = vpop.xlane.xlu0 %2110
    %v2112 = vsel %vm117, %v2108, 0.0
    %2113 = vadd.xlane.f32.xlu0 %v2112
    %v2114 = vpop.xlane.xlu0 %2113
    %v2115 = vmul.f32 %v2111, %v1865
    %v2116 = vmul.f32 %v2114, %v1865
    %v2117 = vadd.f32 %v2115, 1e-05
    %v2118 = vadd.f32 %v2116, 1e-05
    %v2119 = vrsqrt.pop %v2117
    %v2120 = vrsqrt.pop %v2118
    %v2121 = vmul.f32 %v2105, %v2119
    %v2122 = vmul.f32 %v2106, %v2120
    %v2124 = vlaneseq
    %v2125 = vshrl.u32 %v2124, 7
    %v2126 = vsub.s32 0, %v2125
    %v2127 = vrot.slane %v2095, %v2126
    %v2129 = vmul.f32 %v2121, %v2127
    %v2130 = vmul.f32 %v2122, %v2127
    %v2132 = vlaneseq
    %v2133 = vshrl.u32 %v2132, 7
    %v2134 = vsub.s32 0, %v2133
    %v2135 = vrot.slane %v2096, %v2134
    %v2137 = vadd.f32 %v2129, %v2135
    %v2138 = vadd.f32 %v2130, %v2135
    %2139 = vst.msk [vmem:[#allocation8] sm:$0xff] %vm117, %v2137
    %2140 = vst.msk [vmem:[#allocation8 + $0x8] sm:$0xff] %vm117, %v2138
    // Predicated region
    $region86: #{tpu_custom_call.1} parent=1 // pred_check
      _
    $region87: #{tpu_custom_call.1} parent=1 // pred_check_branch
      %2142 = sbr.rel (0) target = $region89
    $region88: #{tpu_custom_call.1} parent=1 // pred_region
      %s2144 = ssub.s32 256, 256
      %2145 = vsyncadd [#allocation4], %s2144
      %s2146 = sshll.u32 [#allocation8], 4
      %s2147 = int_to_ptr.vmem [resolvable:$true] %s2146
      %2152 = dma.vmem_to_hbm [thread:$0]  %s2147, 256, %s18, [#allocation4], 128, 128, 8
    $region89: #{tpu_custom_call.1} parent=1 // pred_fallthru
      _
    // Predicated region
    $region90: #{tpu_custom_call.1} parent=1 // pred_check
      _
    $region91: #{tpu_custom_call.1} parent=1 // pred_check_branch
      %2154 = sbr.rel (0) target = $region93
    $region92: #{tpu_custom_call.1} parent=1 // pred_region
      %s2156 = ssub.s32 256, 256
      %2157 = vsyncadd [#allocation10], %s2156
      %s2158 = sshll.u32 [#allocation9], 4
      %s2159 = int_to_ptr.vmem [resolvable:$true] %s2158
      %2164 = dma.vmem_to_hbm [thread:$0]  %s2159, 256, %s19, [#allocation10], 128, 128, 8
    $region93: #{tpu_custom_call.1} parent=1 // pred_fallthru
      _
    // Predicated region
    $region94: #{tpu_custom_call.1} parent=1 // pred_check
      _
    $region95: #{tpu_custom_call.1} parent=1 // pred_check_branch
      %2166 = sbr.rel (0) target = $region97
    $region96: #{tpu_custom_call.1} parent=1 // pred_region
      %2167 = dma.done [#allocation4], 256
    $region97: #{tpu_custom_call.1} parent=1 // pred_fallthru
      _
    // Predicated region
    $region98: #{tpu_custom_call.1} parent=1 // pred_check
      _
    $region99: #{tpu_custom_call.1} parent=1 // pred_check_branch
      %2169 = sbr.rel (0) target = $region101
    $region100: #{tpu_custom_call.1} parent=1 // pred_region
      %2170 = dma.done [#allocation10], 256
    $region101: #{tpu_custom_call.1} parent=1 // pred_fallthru
      _
    %2171 = vsyncpa [#allocation3], 1
    %2172 = vsyncpa [#allocation6], 1
    %2173 = vsyncpa [#allocation4], 1
    %2174 = vsyncpa [#allocation10], 1

</llo_original>
